<compile_context>
chip_gen: v5e
topology: v5e:2x2
jax: 0.10.0
libtpu: 0.0.40
codegen_flags: <defaults>
</compile_context>

<pallas_src>
import functools
import math

import numpy as np
import jax
import jax.numpy as jnp
from jax.experimental import pallas as pl
from jax.experimental.pallas import tpu as pltpu

LANE = 128


# ------------------------------ Pallas kernel ------------------------------ #

def _make_fused_critic_kernel(n_layers):
    """Fused forward: n_layers x (matmul + bias + ReLU), then VPU value head.

    refs layout: (x, m_0, b_0, ..., m_{n-1}, b_{n-1}, w_lin, b_lin, out)
    """
    def kernel(*refs):
        x_ref = refs[0]
        wl_ref = refs[1 + 2 * n_layers]
        bl_ref = refs[2 + 2 * n_layers]
        o_ref = refs[3 + 2 * n_layers]

        h = x_ref[...]                                    # (TB, K0) f32
        for l in range(n_layers):
            m_ref = refs[1 + 2 * l]
            b_ref = refs[2 + 2 * l]
            # Conv2d(+bias) folded to a dense matmul at init; ReLU on the VPU.
            h = jnp.dot(h, m_ref[...], preferred_element_type=jnp.float32)
            h = jnp.maximum(h + b_ref[...], 0.0)
        # nn.Dropout(): identity in eval/inference mode.
        # TODO(synk): training-mode dropout (RNG mask + 1/(1-p) scaling) omitted.
        # Value head: lane-dense multiply + cross-lane reduce (XLU/VPU) instead
        # of a nearly-empty MXU pass; padded weight entries are zero.
        v = jnp.sum(h * wl_ref[...], axis=-1, keepdims=True) + bl_ref[...]
        o_ref[...] = v.astype(o_ref.dtype)
    return kernel


def fused_critic_pallas(x_flat, folded):
    """Entire v_net forward in ONE pallas_call.

    x_flat : (B, K0) float32, NCHW-flattened network input.
    folded : dict from fold_critic_params() -- operands already f32,
             lane-padded and laid out for the kernel (no per-call prep).
    Returns (B, 1) float32.
    """
    B, K0 = x_flat.shape
    TB = B if B <= 128 else 128            # single full block for small batches
    grid = (pl.cdiv(B, TB),)

    operands = [x_flat]
    in_specs = [pl.BlockSpec((TB, K0), lambda i: (i, 0))]
    for m, b in folded["layers"]:
        operands += [m, b]
        in_specs += [pl.BlockSpec(m.shape, lambda i: (0, 0)),
                     pl.BlockSpec(b.shape, lambda i: (0, 0))]
    operands += [folded["wl"], folded["bl"]]
    in_specs += [pl.BlockSpec(folded["wl"].shape, lambda i: (0, 0)),
                 pl.BlockSpec(folded["bl"].shape, lambda i: (0, 0))]

    kernel = _make_fused_critic_kernel(len(folded["layers"]))
    return pl.pallas_call(
        kernel,
        out_shape=jax.ShapeDtypeStruct((B, 1), jnp.float32),
        grid=grid,
        in_specs=in_specs,
        out_specs=pl.BlockSpec((TB, 1), lambda i: (i, 0)),
        compiler_params=pltpu.CompilerParams(
            # Batch tiles are independent -> shard across v7x's 2 TensorCores
            # once B > 128; harmless single-step loop otherwise.
            dimension_semantics=("parallel",)),
    )(*operands)


# --------------------- init-time conv -> matmul folding --------------------- #

def _conv_as_matrix(weight, bias, in_hw, stride):
    """Fold Conv2d(padding=0) into a dense (Cin*H*W, Cout*HO*WO) matrix plus a
    (Cout*HO*WO,) bias vector, both in NCHW flatten order.  Exact algebraic
    rewrite; runs once at init (numpy, host-side)."""
    cout, cin, kh, kw = weight.shape
    h, w = in_hw
    ho = (h - kh) // stride + 1
    wo = (w - kw) // stride + 1
    m = np.zeros((cin, h, w, cout, ho, wo), np.float32)
    for ki in range(kh):
        for kj in range(kw):
            wk = weight[:, :, ki, kj].T                   # (cin, cout)
            for oh in range(ho):
                ih = oh * stride + ki
                for ow in range(wo):
                    iw = ow * stride + kj
                    m[:, ih, iw, :, oh, ow] = wk
    m = m.reshape(cin * h * w, cout * ho * wo)
    bvec = np.repeat(bias.astype(np.float32), ho * wo)
    return m, bvec, (cout, ho, wo)


def _pad_lanes(n):
    return ((n + LANE - 1) // LANE) * LANE


def fold_critic_params(params, resize_dim):
    """One-time transformation of PyTorch-layout params into fused-kernel
    operands: conv->dense folding (NCHW order), zero-padding of layer widths to
    multiples of 128 (lane-dense), bias as (1, N), linear weight as a padded
    row vector.  Nothing is left to do per forward call."""
    # transform_obs yields a (1, C, W, H) NCHW tensor -> conv spatial = (W, H).
    cur_h, cur_w = resize_dim[1], resize_dim[0]
    prev_true = resize_dim[2] * cur_h * cur_w             # K0 (input not padded)
    prev_pad = prev_true

    layers = []
    for w, b, s in params["convs"]:
        m, bvec, (cout, ho, wo) = _conv_as_matrix(
            np.asarray(w, np.float32), np.asarray(b, np.float32),
            (cur_h, cur_w), s)
        true_n = cout * ho * wo
        pad_n = _pad_lanes(true_n)
        mp = np.zeros((prev_pad, pad_n), np.float32)
        mp[:prev_true, :true_n] = m
        bp = np.zeros((1, pad_n), np.float32)
        bp[0, :true_n] = bvec
        layers.append((jnp.asarray(mp), jnp.asarray(bp)))
        prev_true, prev_pad = true_n, pad_n
        cur_h, cur_w = ho, wo

    # NCHW flatten order is preserved through the folded layers, so the
    # nn.Linear weight is used unpermuted (only zero-padded to lane width).
    wl = np.zeros((1, prev_pad), np.float32)
    wl[0, :prev_true] = np.asarray(params["lin_w"], np.float32)[0]
    bl = np.asarray(params["lin_b"], np.float32).reshape(1, 1)
    return {"layers": layers, "wl": jnp.asarray(wl), "bl": jnp.asarray(bl)}


# ----------------------------- module emulation ----------------------------- #

def init_critic_params(key, resize_dim, hidden_sizes, hidden_kernel,
                       hidden_stride, hidden_padding):
    """PyTorch-layout params with nn.Conv2d / nn.Linear default-init bounds,
    mirroring the layer construction in customCritic.__init__."""
    sizes = [resize_dim[2]] + list(hidden_sizes)
    new_img_size = resize_dim[0]
    convs = []
    for j in range(len(sizes) - 1):
        k, s, p = hidden_kernel[j], hidden_stride[j], hidden_padding[j]
        assert p == 0, "conv->matrix folding implemented for padding=0 (as in the reference size formula)"
        key, kw_, kb_ = jax.random.split(key, 3)
        fan_in = sizes[j] * k * k
        bound = 1.0 / math.sqrt(fan_in)
        w = jax.random.uniform(kw_, (sizes[j + 1], sizes[j], k, k),
                               jnp.float32, -bound, bound)
        b = jax.random.uniform(kb_, (sizes[j + 1],), jnp.float32, -bound, bound)
        convs.append((w, b, s))
        new_img_size = 1 + (new_img_size - k - 2 * p) / s
        assert float(new_img_size).is_integer(), \
            "Stride, padding and kernel cannot tile the input."
    new_img_size = int(new_img_size)
    flat = new_img_size * new_img_size * sizes[-1]
    key, kw_, kb_ = jax.random.split(key, 3)
    bound = 1.0 / math.sqrt(flat)
    lin_w = jax.random.uniform(kw_, (1, flat), jnp.float32, -bound, bound)
    lin_b = jax.random.uniform(kb_, (1,), jnp.float32, -bound, bound)
    return {"convs": convs, "lin_w": lin_w, "lin_b": lin_b}


def transform_obs_batched(obs_rgb, resize_dim):
    """Batched transform_obs: rgb2gray -> resize to resize_dim -> per-obs
    transpose(0, 2)[None], giving an NCHW (B, C, W, H) network input."""
    gray = (0.2125 * obs_rgb[..., 0] + 0.7154 * obs_rgb[..., 1]
            + 0.0721 * obs_rgb[..., 2])                    # skimage rgb2gray
    h, w, c = resize_dim
    assert gray.shape[1:] == (h, w)
    # TODO(synk): general skimage.transform.resize (spline + anti-aliasing) has
    # no clean Pallas/JAX-exact equivalent; with matching spatial dims it
    # reduces to channel replication (size-1 axis interpolation), done here.
    resized = jnp.broadcast_to(gray[..., None], gray.shape + (c,))   # (B,H,W,C)
    return jnp.transpose(resized, (0, 3, 2, 1))            # (B, C, W, H)


def custom_critic_forward_batched(folded, obs_rgb_batch, resize_dim):
    """Batched customCritic.forward: obs_rgb_batch (B, H, W, 3) -> (B,)."""
    x = transform_obs_batched(obs_rgb_batch, resize_dim)   # (B, C, W, H) NCHW
    b = x.shape[0]
    # Same flatten order as torch's Flatten (.view(N, -1) on NCHW); the folded
    # conv matrices consume exactly this order, so no runtime im2col/transpose.
    x_flat = x.reshape(b, -1).astype(jnp.float32)
    v = fused_critic_pallas(x_flat, folded)                # (B, 1)
    return jnp.squeeze(v, -1)                              # torch.squeeze(..., -1)


def custom_critic_forward(folded, obs_rgb, resize_dim):
    """Single-observation forward matching customCritic.forward: returns (1,)."""
    return custom_critic_forward_batched(folded, obs_rgb[None], resize_dim)


# ------------------------------ plain-JAX reference ------------------------- #

def reference_forward(params, obs_rgb_batch, resize_dim):
    """Plain-JAX reference of customCritic.forward (batched over obs)."""
    x = transform_obs_batched(obs_rgb_batch, resize_dim)   # (B, C, W, H)
    for w, b, s in params["convs"]:
        x = jax.lax.conv_general_dilated(
            x, w, window_strides=(s, s), padding="VALID",
            dimension_numbers=("NCHW", "OIHW", "NCHW"))
        x = jnp.maximum(x + b[None, :, None, None], 0.0)
    flat = x.reshape(x.shape[0], -1)
    v = flat @ params["lin_w"].T + params["lin_b"]
    return jnp.squeeze(v, -1)


# ----------------------------------- main ----------------------------------- #

if __name__ == "__main__":
    # Constructor args consistent with customCritic:
    resize_dim = (16, 16, 4)        # (H, W, C) -> network input channels = 4
    hidden_sizes = (8, 16)
    hidden_kernel = (4, 3)          # spatial: 16 -> 7 -> 3 (integer tiling)
    hidden_stride = (2, 2)
    hidden_padding = (0, 0)
    batch = 8                       # batch of observations per fused call

    key = jax.random.PRNGKey(0)
    k_obs, k_par = jax.random.split(key)
    obs_batch = jax.random.uniform(k_obs, (batch, 16, 16, 3), jnp.float32)

    raw = init_critic_params(k_par, resize_dim, hidden_sizes,
                             hidden_kernel, hidden_stride, hidden_padding)
    folded = fold_critic_params(raw, resize_dim)           # one-time prep

    fwd = jax.jit(functools.partial(custom_critic_forward_batched,
                                    resize_dim=resize_dim))
    v = jax.block_until_ready(fwd(folded, obs_batch))
    assert v.shape == (batch,) and v.dtype == jnp.float32

    # Cross-check the fused Pallas forward against a plain-JAX reference of the
    # same module (loose tolerance covers MXU f32-matmul pass differences).
    v_ref = jax.block_until_ready(reference_forward(raw, obs_batch, resize_dim))
    assert jnp.allclose(v, v_ref, atol=5e-2, rtol=5e-2), (v, v_ref)

    print("KERNEL_OK")
</pallas_src>

<mosaic_0001>
module attributes {stable_mosaic.version = 11 : i64} {
  func.func @kernel(%arg0: i32, %arg1: memref<8x1024xf32, #tpu.memory_space<vmem>>, %arg2: memref<1024x512xf32, #tpu.memory_space<vmem>>, %arg3: memref<1x512xf32, #tpu.memory_space<vmem>>, %arg4: memref<512x256xf32, #tpu.memory_space<vmem>>, %arg5: memref<1x256xf32, #tpu.memory_space<vmem>>, %arg6: memref<1x256xf32, #tpu.memory_space<vmem>>, %arg7: memref<1x1xf32, #tpu.memory_space<vmem>>, %arg8: memref<8x1xf32, #tpu.memory_space<vmem>>) attributes {dimension_semantics = [#tpu.dimension_semantics<parallel>], iteration_bounds = array<i64: 1>, scalar_prefetch = 0 : i64, scratch_operands = 0 : i64, tpu.core_type = #tpu.core_type<tc>, window_params = [{transform_indices = @transform_0, window_bounds = array<i64: 8, 1024>}, {pipeline_mode = #tpu.pipeline_mode<synchronous>, transform_indices = @transform_1, window_bounds = array<i64: 1024, 512>}, {pipeline_mode = #tpu.pipeline_mode<synchronous>, transform_indices = @transform_2, window_bounds = array<i64: 1, 512>}, {pipeline_mode = #tpu.pipeline_mode<synchronous>, transform_indices = @transform_3, window_bounds = array<i64: 512, 256>}, {pipeline_mode = #tpu.pipeline_mode<synchronous>, transform_indices = @transform_4, window_bounds = array<i64: 1, 256>}, {pipeline_mode = #tpu.pipeline_mode<synchronous>, transform_indices = @transform_5, window_bounds = array<i64: 1, 256>}, {pipeline_mode = #tpu.pipeline_mode<synchronous>, transform_indices = @transform_6, window_bounds = array<i64: 1, 1>}, {transform_indices = @transform_7, window_bounds = array<i64: 8, 1>}]} {
    %c0 = arith.constant 0 : index
    %c0_0 = arith.constant 0 : index
    %0 = vector.load %arg1[%c0, %c0_0] : memref<8x1024xf32, #tpu.memory_space<vmem>>, vector<8x1024xf32>
    %c0_1 = arith.constant 0 : index
    %c0_2 = arith.constant 0 : index
    %1 = vector.load %arg2[%c0_1, %c0_2] : memref<1024x512xf32, #tpu.memory_space<vmem>>, vector<1024x512xf32>
    %cst = arith.constant dense<0.000000e+00> : vector<8x512xf32>
    %2 = tpu.matmul %0, %1, %cst {dimension_numbers = #tpu.dot_dimension_numbers<[1], [0], [0], [1], [0, 0, 1, 1], [], []>} : vector<8x1024xf32>, vector<1024x512xf32>, vector<8x512xf32> -> vector<8x512xf32>
    %c0_3 = arith.constant 0 : index
    %c0_4 = arith.constant 0 : index
    %3 = vector.load %arg3[%c0_3, %c0_4] : memref<1x512xf32, #tpu.memory_space<vmem>>, vector<1x512xf32>
    %4 = vector.broadcast %3 : vector<1x512xf32> to vector<8x512xf32>
    %5 = arith.addf %2, %4 : vector<8x512xf32>
    %cst_5 = arith.constant 0.000000e+00 : f32
    %6 = vector.broadcast %cst_5 : f32 to vector<8x512xf32>
    %7 = arith.maximumf %5, %6 : vector<8x512xf32>
    %c0_6 = arith.constant 0 : index
    %c0_7 = arith.constant 0 : index
    %8 = vector.load %arg4[%c0_6, %c0_7] : memref<512x256xf32, #tpu.memory_space<vmem>>, vector<512x256xf32>
    %cst_8 = arith.constant dense<0.000000e+00> : vector<8x256xf32>
    %9 = tpu.matmul %7, %8, %cst_8 {dimension_numbers = #tpu.dot_dimension_numbers<[1], [0], [0], [1], [0, 0, 1, 1], [], []>} : vector<8x512xf32>, vector<512x256xf32>, vector<8x256xf32> -> vector<8x256xf32>
    %c0_9 = arith.constant 0 : index
    %c0_10 = arith.constant 0 : index
    %10 = vector.load %arg5[%c0_9, %c0_10] : memref<1x256xf32, #tpu.memory_space<vmem>>, vector<1x256xf32>
    %11 = vector.broadcast %10 : vector<1x256xf32> to vector<8x256xf32>
    %12 = arith.addf %9, %11 : vector<8x256xf32>
    %cst_11 = arith.constant 0.000000e+00 : f32
    %13 = vector.broadcast %cst_11 : f32 to vector<8x256xf32>
    %14 = arith.maximumf %12, %13 : vector<8x256xf32>
    %c0_12 = arith.constant 0 : index
    %c0_13 = arith.constant 0 : index
    %15 = vector.load %arg6[%c0_12, %c0_13] : memref<1x256xf32, #tpu.memory_space<vmem>>, vector<1x256xf32>
    %16 = vector.broadcast %15 : vector<1x256xf32> to vector<8x256xf32>
    %17 = arith.mulf %14, %16 : vector<8x256xf32>
    %cst_14 = arith.constant dense<0.000000e+00> : vector<8xf32>
    %18 = vector.multi_reduction <add>, %17, %cst_14 [1] : vector<8x256xf32> to vector<8xf32>
    %19 = vector.shape_cast %18 : vector<8xf32> to vector<8x1xf32>
    %c0_15 = arith.constant 0 : index
    %c0_16 = arith.constant 0 : index
    %20 = vector.load %arg7[%c0_15, %c0_16] : memref<1x1xf32, #tpu.memory_space<vmem>>, vector<1x1xf32>
    %21 = vector.broadcast %20 : vector<1x1xf32> to vector<8x1xf32>
    %22 = arith.addf %19, %21 : vector<8x1xf32>
    %c0_17 = arith.constant 0 : index
    %c0_18 = arith.constant 0 : index
    %23 = vector.load %arg8[%c0_17, %c0_18] : memref<8x1xf32, #tpu.memory_space<vmem>>, vector<8x1xf32>
    tpu.vector_store %arg8[%c0_17, %c0_18], %22 {strides = array<i32>} : memref<8x1xf32, #tpu.memory_space<vmem>>, vector<8x1xf32>,
    return
  }
  func.func @transform_0(%arg0: i32) -> (i32, i32) {
    %c0_i32 = arith.constant 0 : i32
    %c0_i32_0 = arith.constant 0 : i32
    return %arg0, %c0_i32 : i32, i32
  }
  func.func @transform_1(%arg0: i32) -> (i32, i32) {
    %c0_i32 = arith.constant 0 : i32
    %c0_i32_0 = arith.constant 0 : i32
    %c0_i32_1 = arith.constant 0 : i32
    return %c0_i32, %c0_i32_0 : i32, i32
  }
  func.func @transform_2(%arg0: i32) -> (i32, i32) {
    %c0_i32 = arith.constant 0 : i32
    %c0_i32_0 = arith.constant 0 : i32
    %c0_i32_1 = arith.constant 0 : i32
    return %c0_i32, %c0_i32_0 : i32, i32
  }
  func.func @transform_3(%arg0: i32) -> (i32, i32) {
    %c0_i32 = arith.constant 0 : i32
    %c0_i32_0 = arith.constant 0 : i32
    %c0_i32_1 = arith.constant 0 : i32
    return %c0_i32, %c0_i32_0 : i32, i32
  }
  func.func @transform_4(%arg0: i32) -> (i32, i32) {
    %c0_i32 = arith.constant 0 : i32
    %c0_i32_0 = arith.constant 0 : i32
    %c0_i32_1 = arith.constant 0 : i32
    return %c0_i32, %c0_i32_0 : i32, i32
  }
  func.func @transform_5(%arg0: i32) -> (i32, i32) {
    %c0_i32 = arith.constant 0 : i32
    %c0_i32_0 = arith.constant 0 : i32
    %c0_i32_1 = arith.constant 0 : i32
    return %c0_i32, %c0_i32_0 : i32, i32
  }
  func.func @transform_6(%arg0: i32) -> (i32, i32) {
    %c0_i32 = arith.constant 0 : i32
    %c0_i32_0 = arith.constant 0 : i32
    %c0_i32_1 = arith.constant 0 : i32
    return %c0_i32, %c0_i32_0 : i32, i32
  }
  func.func @transform_7(%arg0: i32) -> (i32, i32) {
    %c0_i32 = arith.constant 0 : i32
    %c0_i32_0 = arith.constant 0 : i32
    return %arg0, %c0_i32 : i32, i32
  }
}

</mosaic_0001>

<llo_original>
// kernel: custom_critic_forward_batched.1
$region0: #{custom_critic_forward_batched.1}
  #allocation0 [shape = 'u32[]', space=smem, size = 0x4, offset = 0x4, fixed_abs, tag = 'smem constant byte address 0x4 - core index']
  #allocation1 [shape = 'u32[72,128]{1,0:T(1,128)}', space=vmem, size = 0x9000, scoped, tag = 'internal scratch']
  #allocation2 [shape = 'f32[1,1]{1,0:T(1,128)S(1)}', space=vmem, size = 0x200, scoped, tag = 'scoped memory for custom_critic_forward_batched.1']
  %s0 = inlined_call_operand.vmem [shape: f32[8,1024], index: 0, kind: input, shape index: {}]
  %s1 = inlined_call_operand.hbm [shape: f32[1024,512], index: 1, kind: input, shape index: {}]
  %s2 = inlined_call_operand.hbm [shape: f32[1,512], index: 2, kind: input, shape index: {}]
  %s3 = inlined_call_operand.hbm [shape: f32[512,256], index: 3, kind: input, shape index: {}]
  %s4 = inlined_call_operand.hbm [shape: f32[1,256], index: 4, kind: input, shape index: {}]
  %s5 = inlined_call_operand.hbm [shape: f32[1,256], index: 5, kind: input, shape index: {}]
  %s6 = inlined_call_operand.<no memory space> [shape: f32[1,1], index: 6, kind: input, shape index: {}]
  %s7 = inlined_call_operand.vmem [shape: f32[8,1], index: 7, kind: output, shape index: {}]
  %s8 = sld [smem:[#allocation0]]
  $region58: #{custom_critic_forward_batched.1} parent=0
    _
  %s10 = ssub.s32 1, %s8
  %s11 = scalar_select 0, %s10, %s8
  %v12 = vstv %s6
  %13 = vst [vmem:[#allocation2] sm:$0x1] %v12
  $region1: #{custom_critic_forward_batched.1} parent=0
    #allocation3 [shape = 'u8[2097152]{0}', space=vmem, size = 0x200000, scoped, tag = 'input window, operand 1, single buffered']
    #allocation4 [shape = 's32[1]{0}', space=sflag, size = 0x4, scoped, tag = 'scoped memory for custom_critic_forward_batched.1']
    #allocation5 [shape = 'u8[2048]{0}', space=vmem, size = 0x800, scoped, tag = 'input window, operand 2, single buffered']
    #allocation6 [shape = 's32[1]{0}', space=sflag, size = 0x4, scoped, tag = 'scoped memory for custom_critic_forward_batched.1']
    #allocation7 [shape = 'u8[524288]{0}', space=vmem, size = 0x80000, scoped, tag = 'input window, operand 3, single buffered']
    #allocation8 [shape = 'u8[1024]{0}', space=vmem, size = 0x400, scoped, tag = 'input window, operand 4, single buffered']
    #allocation9 [shape = 's32[1]{0}', space=sflag, size = 0x4, scoped, tag = 'scoped memory for custom_critic_forward_batched.1']
    #allocation10 [shape = 'u8[1024]{0}', space=vmem, size = 0x400, scoped, tag = 'input window, operand 5, single buffered']
    %14 = vsyncpa [#allocation4], 0
    %15 = vsyncpa [#allocation6], 0
    %16 = vsyncpa [#allocation9], 0
    // Predicated region
    $region2: #{custom_critic_forward_batched.1} parent=1 // pred_check
      _
    $region3: #{custom_critic_forward_batched.1} parent=1 // pred_check_branch
      %18 = sbr.rel (0) target = $region5
    $region4: #{custom_critic_forward_batched.1} parent=1 // pred_region
      _
    $region5: #{custom_critic_forward_batched.1} parent=1 // pred_fallthru
      _
    // Predicated region
    $region6: #{custom_critic_forward_batched.1} parent=1 // pred_check
      _
    $region7: #{custom_critic_forward_batched.1} parent=1 // pred_check_branch
      %20 = sbr.rel (0) target = $region9
    $region8: #{custom_critic_forward_batched.1} parent=1 // pred_region
      %22 = vsyncadd [#allocation4], 0
      %s23 = sshll.u32 %s1, 4
      %s24 = int_to_ptr.hbm [resolvable:$true] %s23
      %s25 = sshll.u32 [#allocation3], 4
      %s26 = int_to_ptr.vmem [resolvable:$true] %s25
      %31 = dma.hbm_to_vmem [thread:$0]  %s24, 65536, %s26, [#allocation4], 512, 512, 32
    $region9: #{custom_critic_forward_batched.1} parent=1 // pred_fallthru
      _
    // Predicated region
    $region10: #{custom_critic_forward_batched.1} parent=1 // pred_check
      _
    $region11: #{custom_critic_forward_batched.1} parent=1 // pred_check_branch
      %33 = sbr.rel (0) target = $region13
    $region12: #{custom_critic_forward_batched.1} parent=1 // pred_region
      %35 = vsyncadd [#allocation6], 0
      %s37 = sshll.u32 %s2, 4
      %s38 = int_to_ptr.hbm [resolvable:$true] %s37
      %s39 = sshll.u32 [#allocation5], 4
      %s40 = int_to_ptr.vmem [resolvable:$true] %s39
      %42 = dma.hbm_to_vmem [thread:$0]  %s38, 64, %s40, [#allocation6]
    $region13: #{custom_critic_forward_batched.1} parent=1 // pred_fallthru
      _
    // Predicated region
    $region14: #{custom_critic_forward_batched.1} parent=1 // pred_check
      _
    $region15: #{custom_critic_forward_batched.1} parent=1 // pred_check_branch
      %44 = sbr.rel (0) target = $region17
    $region16: #{custom_critic_forward_batched.1} parent=1 // pred_region
      %46 = vsyncadd [#allocation6], 0
      %s47 = sshll.u32 %s3, 4
      %s48 = int_to_ptr.hbm [resolvable:$true] %s47
      %s49 = sshll.u32 [#allocation7], 4
      %s50 = int_to_ptr.vmem [resolvable:$true] %s49
      %55 = dma.hbm_to_vmem [thread:$0]  %s48, 16384, %s50, [#allocation6], 256, 256, 16
    $region17: #{custom_critic_forward_batched.1} parent=1 // pred_fallthru
      _
    // Predicated region
    $region18: #{custom_critic_forward_batched.1} parent=1 // pred_check
      _
    $region19: #{custom_critic_forward_batched.1} parent=1 // pred_check_branch
      %57 = sbr.rel (0) target = $region21
    $region20: #{custom_critic_forward_batched.1} parent=1 // pred_region
      %59 = vsyncadd [#allocation9], 0
      %s61 = sshll.u32 %s4, 4
      %s62 = int_to_ptr.hbm [resolvable:$true] %s61
      %s63 = sshll.u32 [#allocation8], 4
      %s64 = int_to_ptr.vmem [resolvable:$true] %s63
      %66 = dma.hbm_to_vmem [thread:$0]  %s62, 32, %s64, [#allocation9]
    $region21: #{custom_critic_forward_batched.1} parent=1 // pred_fallthru
      _
    // Predicated region
    $region22: #{custom_critic_forward_batched.1} parent=1 // pred_check
      _
    $region23: #{custom_critic_forward_batched.1} parent=1 // pred_check_branch
      %68 = sbr.rel (0) target = $region25
    $region24: #{custom_critic_forward_batched.1} parent=1 // pred_region
      %70 = vsyncadd [#allocation9], 0
      %s72 = sshll.u32 %s5, 4
      %s73 = int_to_ptr.hbm [resolvable:$true] %s72
      %s74 = sshll.u32 [#allocation10], 4
      %s75 = int_to_ptr.vmem [resolvable:$true] %s74
      %77 = dma.hbm_to_vmem [thread:$0]  %s73, 32, %s75, [#allocation9]
    $region25: #{custom_critic_forward_batched.1} parent=1 // pred_fallthru
      _
    // Predicated region
    $region26: #{custom_critic_forward_batched.1} parent=1 // pred_check
      _
    $region27: #{custom_critic_forward_batched.1} parent=1 // pred_check_branch
      %79 = sbr.rel (0) target = $region29
    $region28: #{custom_critic_forward_batched.1} parent=1 // pred_region
      _
    $region29: #{custom_critic_forward_batched.1} parent=1 // pred_fallthru
      _
    // Predicated region
    $region30: #{custom_critic_forward_batched.1} parent=1 // pred_check
      _
    $region31: #{custom_critic_forward_batched.1} parent=1 // pred_check_branch
      %81 = sbr.rel (0) target = $region33
    $region32: #{custom_critic_forward_batched.1} parent=1 // pred_region
      %83 = dma.done [#allocation4], 65536
    $region33: #{custom_critic_forward_batched.1} parent=1 // pred_fallthru
      _
    // Predicated region
    $region34: #{custom_critic_forward_batched.1} parent=1 // pred_check
      _
    $region35: #{custom_critic_forward_batched.1} parent=1 // pred_check_branch
      %85 = sbr.rel (0) target = $region37
    $region36: #{custom_critic_forward_batched.1} parent=1 // pred_region
      %87 = dma.done [#allocation6], 64
    $region37: #{custom_critic_forward_batched.1} parent=1 // pred_fallthru
      _
    // Predicated region
    $region38: #{custom_critic_forward_batched.1} parent=1 // pred_check
      _
    $region39: #{custom_critic_forward_batched.1} parent=1 // pred_check_branch
      %89 = sbr.rel (0) target = $region41
    $region40: #{custom_critic_forward_batched.1} parent=1 // pred_region
      %91 = dma.done [#allocation6], 16384
    $region41: #{custom_critic_forward_batched.1} parent=1 // pred_fallthru
      _
    // Predicated region
    $region42: #{custom_critic_forward_batched.1} parent=1 // pred_check
      _
    $region43: #{custom_critic_forward_batched.1} parent=1 // pred_check_branch
      %93 = sbr.rel (0) target = $region45
    $region44: #{custom_critic_forward_batched.1} parent=1 // pred_region
      %95 = dma.done [#allocation9], 32
    $region45: #{custom_critic_forward_batched.1} parent=1 // pred_fallthru
      _
    // Predicated region
    $region46: #{custom_critic_forward_batched.1} parent=1 // pred_check
      _
    $region47: #{custom_critic_forward_batched.1} parent=1 // pred_check_branch
      %97 = sbr.rel (0) target = $region49
    $region48: #{custom_critic_forward_batched.1} parent=1 // pred_region
      %99 = dma.done [#allocation9], 32
    $region49: #{custom_critic_forward_batched.1} parent=1 // pred_fallthru
      _
    %v100 = vld [vmem:[%s0] sm:$0xff]
    %v101 = vld [vmem:[%s0 + $0x8] sm:$0xff]
    %v102 = vld [vmem:[%s0 + $0x10] sm:$0xff]
    %v103 = vld [vmem:[%s0 + $0x18] sm:$0xff]
    %v104 = vld [vmem:[%s0 + $0x20] sm:$0xff]
    %v105 = vld [vmem:[%s0 + $0x28] sm:$0xff]
    %v106 = vld [vmem:[%s0 + $0x30] sm:$0xff]
    %v107 = vld [vmem:[%s0 + $0x38] sm:$0xff]
    %v108 = vld [vmem:[#allocation3] sm:$0xff]
    %v109 = vld [vmem:[#allocation3 + $0x8] sm:$0xff]
    %v110 = vld [vmem:[#allocation3 + $0x10] sm:$0xff]
    %v111 = vld [vmem:[#allocation3 + $0x18] sm:$0xff]
    %v112 = vld [vmem:[#allocation3 + $0x20] sm:$0xff]
    %v113 = vld [vmem:[#allocation3 + $0x28] sm:$0xff]
    %v114 = vld [vmem:[#allocation3 + $0x30] sm:$0xff]
    %v115 = vld [vmem:[#allocation3 + $0x38] sm:$0xff]
    %v116 = vld [vmem:[#allocation3 + $0x40] sm:$0xff]
    %v117 = vld [vmem:[#allocation3 + $0x48] sm:$0xff]
    %v118 = vld [vmem:[#allocation3 + $0x50] sm:$0xff]
    %v119 = vld [vmem:[#allocation3 + $0x58] sm:$0xff]
    %v120 = vld [vmem:[#allocation3 + $0x60] sm:$0xff]
    %v121 = vld [vmem:[#allocation3 + $0x68] sm:$0xff]
    %v122 = vld [vmem:[#allocation3 + $0x70] sm:$0xff]
    %v123 = vld [vmem:[#allocation3 + $0x78] sm:$0xff]
    %v124 = vld [vmem:[#allocation3 + $0x80] sm:$0xff]
    %v125 = vld [vmem:[#allocation3 + $0x88] sm:$0xff]
    %v126 = vld [vmem:[#allocation3 + $0x90] sm:$0xff]
    %v127 = vld [vmem:[#allocation3 + $0x98] sm:$0xff]
    %v128 = vld [vmem:[#allocation3 + $0xa0] sm:$0xff]
    %v129 = vld [vmem:[#allocation3 + $0xa8] sm:$0xff]
    %v130 = vld [vmem:[#allocation3 + $0xb0] sm:$0xff]
    %v131 = vld [vmem:[#allocation3 + $0xb8] sm:$0xff]
    %v132 = vld [vmem:[#allocation3 + $0xc0] sm:$0xff]
    %v133 = vld [vmem:[#allocation3 + $0xc8] sm:$0xff]
    %v134 = vld [vmem:[#allocation3 + $0xd0] sm:$0xff]
    %v135 = vld [vmem:[#allocation3 + $0xd8] sm:$0xff]
    %v136 = vld [vmem:[#allocation3 + $0xe0] sm:$0xff]
    %v137 = vld [vmem:[#allocation3 + $0xe8] sm:$0xff]
    %v138 = vld [vmem:[#allocation3 + $0xf0] sm:$0xff]
    %v139 = vld [vmem:[#allocation3 + $0xf8] sm:$0xff]
    %v140 = vld [vmem:[#allocation3 + $0x100] sm:$0xff]
    %v141 = vld [vmem:[#allocation3 + $0x108] sm:$0xff]
    %v142 = vld [vmem:[#allocation3 + $0x110] sm:$0xff]
    %v143 = vld [vmem:[#allocation3 + $0x118] sm:$0xff]
    %v144 = vld [vmem:[#allocation3 + $0x120] sm:$0xff]
    %v145 = vld [vmem:[#allocation3 + $0x128] sm:$0xff]
    %v146 = vld [vmem:[#allocation3 + $0x130] sm:$0xff]
    %v147 = vld [vmem:[#allocation3 + $0x138] sm:$0xff]
    %v148 = vld [vmem:[#allocation3 + $0x140] sm:$0xff]
    %v149 = vld [vmem:[#allocation3 + $0x148] sm:$0xff]
    %v150 = vld [vmem:[#allocation3 + $0x150] sm:$0xff]
    %v151 = vld [vmem:[#allocation3 + $0x158] sm:$0xff]
    %v152 = vld [vmem:[#allocation3 + $0x160] sm:$0xff]
    %v153 = vld [vmem:[#allocation3 + $0x168] sm:$0xff]
    %v154 = vld [vmem:[#allocation3 + $0x170] sm:$0xff]
    %v155 = vld [vmem:[#allocation3 + $0x178] sm:$0xff]
    %v156 = vld [vmem:[#allocation3 + $0x180] sm:$0xff]
    %v157 = vld [vmem:[#allocation3 + $0x188] sm:$0xff]
    %v158 = vld [vmem:[#allocation3 + $0x190] sm:$0xff]
    %v159 = vld [vmem:[#allocation3 + $0x198] sm:$0xff]
    %v160 = vld [vmem:[#allocation3 + $0x1a0] sm:$0xff]
    %v161 = vld [vmem:[#allocation3 + $0x1a8] sm:$0xff]
    %v162 = vld [vmem:[#allocation3 + $0x1b0] sm:$0xff]
    %v163 = vld [vmem:[#allocation3 + $0x1b8] sm:$0xff]
    %v164 = vld [vmem:[#allocation3 + $0x1c0] sm:$0xff]
    %v165 = vld [vmem:[#allocation3 + $0x1c8] sm:$0xff]
    %v166 = vld [vmem:[#allocation3 + $0x1d0] sm:$0xff]
    %v167 = vld [vmem:[#allocation3 + $0x1d8] sm:$0xff]
    %v168 = vld [vmem:[#allocation3 + $0x1e0] sm:$0xff]
    %v169 = vld [vmem:[#allocation3 + $0x1e8] sm:$0xff]
    %v170 = vld [vmem:[#allocation3 + $0x1f0] sm:$0xff]
    %v171 = vld [vmem:[#allocation3 + $0x1f8] sm:$0xff]
    %v172 = vld [vmem:[#allocation3 + $0x200] sm:$0xff]
    %v173 = vld [vmem:[#allocation3 + $0x208] sm:$0xff]
    %v174 = vld [vmem:[#allocation3 + $0x210] sm:$0xff]
    %v175 = vld [vmem:[#allocation3 + $0x218] sm:$0xff]
    %v176 = vld [vmem:[#allocation3 + $0x220] sm:$0xff]
    %v177 = vld [vmem:[#allocation3 + $0x228] sm:$0xff]
    %v178 = vld [vmem:[#allocation3 + $0x230] sm:$0xff]
    %v179 = vld [vmem:[#allocation3 + $0x238] sm:$0xff]
    %v180 = vld [vmem:[#allocation3 + $0x240] sm:$0xff]
    %v181 = vld [vmem:[#allocation3 + $0x248] sm:$0xff]
    %v182 = vld [vmem:[#allocation3 + $0x250] sm:$0xff]
    %v183 = vld [vmem:[#allocation3 + $0x258] sm:$0xff]
    %v184 = vld [vmem:[#allocation3 + $0x260] sm:$0xff]
    %v185 = vld [vmem:[#allocation3 + $0x268] sm:$0xff]
    %v186 = vld [vmem:[#allocation3 + $0x270] sm:$0xff]
    %v187 = vld [vmem:[#allocation3 + $0x278] sm:$0xff]
    %v188 = vld [vmem:[#allocation3 + $0x280] sm:$0xff]
    %v189 = vld [vmem:[#allocation3 + $0x288] sm:$0xff]
    %v190 = vld [vmem:[#allocation3 + $0x290] sm:$0xff]
    %v191 = vld [vmem:[#allocation3 + $0x298] sm:$0xff]
    %v192 = vld [vmem:[#allocation3 + $0x2a0] sm:$0xff]
    %v193 = vld [vmem:[#allocation3 + $0x2a8] sm:$0xff]
    %v194 = vld [vmem:[#allocation3 + $0x2b0] sm:$0xff]
    %v195 = vld [vmem:[#allocation3 + $0x2b8] sm:$0xff]
    %v196 = vld [vmem:[#allocation3 + $0x2c0] sm:$0xff]
    %v197 = vld [vmem:[#allocation3 + $0x2c8] sm:$0xff]
    %v198 = vld [vmem:[#allocation3 + $0x2d0] sm:$0xff]
    %v199 = vld [vmem:[#allocation3 + $0x2d8] sm:$0xff]
    %v200 = vld [vmem:[#allocation3 + $0x2e0] sm:$0xff]
    %v201 = vld [vmem:[#allocation3 + $0x2e8] sm:$0xff]
    %v202 = vld [vmem:[#allocation3 + $0x2f0] sm:$0xff]
    %v203 = vld [vmem:[#allocation3 + $0x2f8] sm:$0xff]
    %v204 = vld [vmem:[#allocation3 + $0x300] sm:$0xff]
    %v205 = vld [vmem:[#allocation3 + $0x308] sm:$0xff]
    %v206 = vld [vmem:[#allocation3 + $0x310] sm:$0xff]
    %v207 = vld [vmem:[#allocation3 + $0x318] sm:$0xff]
    %v208 = vld [vmem:[#allocation3 + $0x320] sm:$0xff]
    %v209 = vld [vmem:[#allocation3 + $0x328] sm:$0xff]
    %v210 = vld [vmem:[#allocation3 + $0x330] sm:$0xff]
    %v211 = vld [vmem:[#allocation3 + $0x338] sm:$0xff]
    %v212 = vld [vmem:[#allocation3 + $0x340] sm:$0xff]
    %v213 = vld [vmem:[#allocation3 + $0x348] sm:$0xff]
    %v214 = vld [vmem:[#allocation3 + $0x350] sm:$0xff]
    %v215 = vld [vmem:[#allocation3 + $0x358] sm:$0xff]
    %v216 = vld [vmem:[#allocation3 + $0x360] sm:$0xff]
    %v217 = vld [vmem:[#allocation3 + $0x368] sm:$0xff]
    %v218 = vld [vmem:[#allocation3 + $0x370] sm:$0xff]
    %v219 = vld [vmem:[#allocation3 + $0x378] sm:$0xff]
    %v220 = vld [vmem:[#allocation3 + $0x380] sm:$0xff]
    %v221 = vld [vmem:[#allocation3 + $0x388] sm:$0xff]
    %v222 = vld [vmem:[#allocation3 + $0x390] sm:$0xff]
    %v223 = vld [vmem:[#allocation3 + $0x398] sm:$0xff]
    %v224 = vld [vmem:[#allocation3 + $0x3a0] sm:$0xff]
    %v225 = vld [vmem:[#allocation3 + $0x3a8] sm:$0xff]
    %v226 = vld [vmem:[#allocation3 + $0x3b0] sm:$0xff]
    %v227 = vld [vmem:[#allocation3 + $0x3b8] sm:$0xff]
    %v228 = vld [vmem:[#allocation3 + $0x3c0] sm:$0xff]
    %v229 = vld [vmem:[#allocation3 + $0x3c8] sm:$0xff]
    %v230 = vld [vmem:[#allocation3 + $0x3d0] sm:$0xff]
    %v231 = vld [vmem:[#allocation3 + $0x3d8] sm:$0xff]
    %v232 = vld [vmem:[#allocation3 + $0x3e0] sm:$0xff]
    %v233 = vld [vmem:[#allocation3 + $0x3e8] sm:$0xff]
    %v234 = vld [vmem:[#allocation3 + $0x3f0] sm:$0xff]
    %v235 = vld [vmem:[#allocation3 + $0x3f8] sm:$0xff]
    %v236 = vld [vmem:[#allocation3 + $0x400] sm:$0xff]
    %v237 = vld [vmem:[#allocation3 + $0x408] sm:$0xff]
    %v238 = vld [vmem:[#allocation3 + $0x410] sm:$0xff]
    %v239 = vld [vmem:[#allocation3 + $0x418] sm:$0xff]
    %v240 = vld [vmem:[#allocation3 + $0x420] sm:$0xff]
    %v241 = vld [vmem:[#allocation3 + $0x428] sm:$0xff]
    %v242 = vld [vmem:[#allocation3 + $0x430] sm:$0xff]
    %v243 = vld [vmem:[#allocation3 + $0x438] sm:$0xff]
    %v244 = vld [vmem:[#allocation3 + $0x440] sm:$0xff]
    %v245 = vld [vmem:[#allocation3 + $0x448] sm:$0xff]
    %v246 = vld [vmem:[#allocation3 + $0x450] sm:$0xff]
    %v247 = vld [vmem:[#allocation3 + $0x458] sm:$0xff]
    %v248 = vld [vmem:[#allocation3 + $0x460] sm:$0xff]
    %v249 = vld [vmem:[#allocation3 + $0x468] sm:$0xff]
    %v250 = vld [vmem:[#allocation3 + $0x470] sm:$0xff]
    %v251 = vld [vmem:[#allocation3 + $0x478] sm:$0xff]
    %v252 = vld [vmem:[#allocation3 + $0x480] sm:$0xff]
    %v253 = vld [vmem:[#allocation3 + $0x488] sm:$0xff]
    %v254 = vld [vmem:[#allocation3 + $0x490] sm:$0xff]
    %v255 = vld [vmem:[#allocation3 + $0x498] sm:$0xff]
    %v256 = vld [vmem:[#allocation3 + $0x4a0] sm:$0xff]
    %v257 = vld [vmem:[#allocation3 + $0x4a8] sm:$0xff]
    %v258 = vld [vmem:[#allocation3 + $0x4b0] sm:$0xff]
    %v259 = vld [vmem:[#allocation3 + $0x4b8] sm:$0xff]
    %v260 = vld [vmem:[#allocation3 + $0x4c0] sm:$0xff]
    %v261 = vld [vmem:[#allocation3 + $0x4c8] sm:$0xff]
    %v262 = vld [vmem:[#allocation3 + $0x4d0] sm:$0xff]
    %v263 = vld [vmem:[#allocation3 + $0x4d8] sm:$0xff]
    %v264 = vld [vmem:[#allocation3 + $0x4e0] sm:$0xff]
    %v265 = vld [vmem:[#allocation3 + $0x4e8] sm:$0xff]
    %v266 = vld [vmem:[#allocation3 + $0x4f0] sm:$0xff]
    %v267 = vld [vmem:[#allocation3 + $0x4f8] sm:$0xff]
    %v268 = vld [vmem:[#allocation3 + $0x500] sm:$0xff]
    %v269 = vld [vmem:[#allocation3 + $0x508] sm:$0xff]
    %v270 = vld [vmem:[#allocation3 + $0x510] sm:$0xff]
    %v271 = vld [vmem:[#allocation3 + $0x518] sm:$0xff]
    %v272 = vld [vmem:[#allocation3 + $0x520] sm:$0xff]
    %v273 = vld [vmem:[#allocation3 + $0x528] sm:$0xff]
    %v274 = vld [vmem:[#allocation3 + $0x530] sm:$0xff]
    %v275 = vld [vmem:[#allocation3 + $0x538] sm:$0xff]
    %v276 = vld [vmem:[#allocation3 + $0x540] sm:$0xff]
    %v277 = vld [vmem:[#allocation3 + $0x548] sm:$0xff]
    %v278 = vld [vmem:[#allocation3 + $0x550] sm:$0xff]
    %v279 = vld [vmem:[#allocation3 + $0x558] sm:$0xff]
    %v280 = vld [vmem:[#allocation3 + $0x560] sm:$0xff]
    %v281 = vld [vmem:[#allocation3 + $0x568] sm:$0xff]
    %v282 = vld [vmem:[#allocation3 + $0x570] sm:$0xff]
    %v283 = vld [vmem:[#allocation3 + $0x578] sm:$0xff]
    %v284 = vld [vmem:[#allocation3 + $0x580] sm:$0xff]
    %v285 = vld [vmem:[#allocation3 + $0x588] sm:$0xff]
    %v286 = vld [vmem:[#allocation3 + $0x590] sm:$0xff]
    %v287 = vld [vmem:[#allocation3 + $0x598] sm:$0xff]
    %v288 = vld [vmem:[#allocation3 + $0x5a0] sm:$0xff]
    %v289 = vld [vmem:[#allocation3 + $0x5a8] sm:$0xff]
    %v290 = vld [vmem:[#allocation3 + $0x5b0] sm:$0xff]
    %v291 = vld [vmem:[#allocation3 + $0x5b8] sm:$0xff]
    %v292 = vld [vmem:[#allocation3 + $0x5c0] sm:$0xff]
    %v293 = vld [vmem:[#allocation3 + $0x5c8] sm:$0xff]
    %v294 = vld [vmem:[#allocation3 + $0x5d0] sm:$0xff]
    %v295 = vld [vmem:[#allocation3 + $0x5d8] sm:$0xff]
    %v296 = vld [vmem:[#allocation3 + $0x5e0] sm:$0xff]
    %v297 = vld [vmem:[#allocation3 + $0x5e8] sm:$0xff]
    %v298 = vld [vmem:[#allocation3 + $0x5f0] sm:$0xff]
    %v299 = vld [vmem:[#allocation3 + $0x5f8] sm:$0xff]
    %v300 = vld [vmem:[#allocation3 + $0x600] sm:$0xff]
    %v301 = vld [vmem:[#allocation3 + $0x608] sm:$0xff]
    %v302 = vld [vmem:[#allocation3 + $0x610] sm:$0xff]
    %v303 = vld [vmem:[#allocation3 + $0x618] sm:$0xff]
    %v304 = vld [vmem:[#allocation3 + $0x620] sm:$0xff]
    %v305 = vld [vmem:[#allocation3 + $0x628] sm:$0xff]
    %v306 = vld [vmem:[#allocation3 + $0x630] sm:$0xff]
    %v307 = vld [vmem:[#allocation3 + $0x638] sm:$0xff]
    %v308 = vld [vmem:[#allocation3 + $0x640] sm:$0xff]
    %v309 = vld [vmem:[#allocation3 + $0x648] sm:$0xff]
    %v310 = vld [vmem:[#allocation3 + $0x650] sm:$0xff]
    %v311 = vld [vmem:[#allocation3 + $0x658] sm:$0xff]
    %v312 = vld [vmem:[#allocation3 + $0x660] sm:$0xff]
    %v313 = vld [vmem:[#allocation3 + $0x668] sm:$0xff]
    %v314 = vld [vmem:[#allocation3 + $0x670] sm:$0xff]
    %v315 = vld [vmem:[#allocation3 + $0x678] sm:$0xff]
    %v316 = vld [vmem:[#allocation3 + $0x680] sm:$0xff]
    %v317 = vld [vmem:[#allocation3 + $0x688] sm:$0xff]
    %v318 = vld [vmem:[#allocation3 + $0x690] sm:$0xff]
    %v319 = vld [vmem:[#allocation3 + $0x698] sm:$0xff]
    %v320 = vld [vmem:[#allocation3 + $0x6a0] sm:$0xff]
    %v321 = vld [vmem:[#allocation3 + $0x6a8] sm:$0xff]
    %v322 = vld [vmem:[#allocation3 + $0x6b0] sm:$0xff]
    %v323 = vld [vmem:[#allocation3 + $0x6b8] sm:$0xff]
    %v324 = vld [vmem:[#allocation3 + $0x6c0] sm:$0xff]
    %v325 = vld [vmem:[#allocation3 + $0x6c8] sm:$0xff]
    %v326 = vld [vmem:[#allocation3 + $0x6d0] sm:$0xff]
    %v327 = vld [vmem:[#allocation3 + $0x6d8] sm:$0xff]
    %v328 = vld [vmem:[#allocation3 + $0x6e0] sm:$0xff]
    %v329 = vld [vmem:[#allocation3 + $0x6e8] sm:$0xff]
    %v330 = vld [vmem:[#allocation3 + $0x6f0] sm:$0xff]
    %v331 = vld [vmem:[#allocation3 + $0x6f8] sm:$0xff]
    %v332 = vld [vmem:[#allocation3 + $0x700] sm:$0xff]
    %v333 = vld [vmem:[#allocation3 + $0x708] sm:$0xff]
    %v334 = vld [vmem:[#allocation3 + $0x710] sm:$0xff]
    %v335 = vld [vmem:[#allocation3 + $0x718] sm:$0xff]
    %v336 = vld [vmem:[#allocation3 + $0x720] sm:$0xff]
    %v337 = vld [vmem:[#allocation3 + $0x728] sm:$0xff]
    %v338 = vld [vmem:[#allocation3 + $0x730] sm:$0xff]
    %v339 = vld [vmem:[#allocation3 + $0x738] sm:$0xff]
    %v340 = vld [vmem:[#allocation3 + $0x740] sm:$0xff]
    %v341 = vld [vmem:[#allocation3 + $0x748] sm:$0xff]
    %v342 = vld [vmem:[#allocation3 + $0x750] sm:$0xff]
    %v343 = vld [vmem:[#allocation3 + $0x758] sm:$0xff]
    %v344 = vld [vmem:[#allocation3 + $0x760] sm:$0xff]
    %v345 = vld [vmem:[#allocation3 + $0x768] sm:$0xff]
    %v346 = vld [vmem:[#allocation3 + $0x770] sm:$0xff]
    %v347 = vld [vmem:[#allocation3 + $0x778] sm:$0xff]
    %v348 = vld [vmem:[#allocation3 + $0x780] sm:$0xff]
    %v349 = vld [vmem:[#allocation3 + $0x788] sm:$0xff]
    %v350 = vld [vmem:[#allocation3 + $0x790] sm:$0xff]
    %v351 = vld [vmem:[#allocation3 + $0x798] sm:$0xff]
    %v352 = vld [vmem:[#allocation3 + $0x7a0] sm:$0xff]
    %v353 = vld [vmem:[#allocation3 + $0x7a8] sm:$0xff]
    %v354 = vld [vmem:[#allocation3 + $0x7b0] sm:$0xff]
    %v355 = vld [vmem:[#allocation3 + $0x7b8] sm:$0xff]
    %v356 = vld [vmem:[#allocation3 + $0x7c0] sm:$0xff]
    %v357 = vld [vmem:[#allocation3 + $0x7c8] sm:$0xff]
    %v358 = vld [vmem:[#allocation3 + $0x7d0] sm:$0xff]
    %v359 = vld [vmem:[#allocation3 + $0x7d8] sm:$0xff]
    %v360 = vld [vmem:[#allocation3 + $0x7e0] sm:$0xff]
    %v361 = vld [vmem:[#allocation3 + $0x7e8] sm:$0xff]
    %v362 = vld [vmem:[#allocation3 + $0x7f0] sm:$0xff]
    %v363 = vld [vmem:[#allocation3 + $0x7f8] sm:$0xff]
    %v364 = vld [vmem:[#allocation3 + $0x800] sm:$0xff]
    %v365 = vld [vmem:[#allocation3 + $0x808] sm:$0xff]
    %v366 = vld [vmem:[#allocation3 + $0x810] sm:$0xff]
    %v367 = vld [vmem:[#allocation3 + $0x818] sm:$0xff]
    %v368 = vld [vmem:[#allocation3 + $0x820] sm:$0xff]
    %v369 = vld [vmem:[#allocation3 + $0x828] sm:$0xff]
    %v370 = vld [vmem:[#allocation3 + $0x830] sm:$0xff]
    %v371 = vld [vmem:[#allocation3 + $0x838] sm:$0xff]
    %v372 = vld [vmem:[#allocation3 + $0x840] sm:$0xff]
    %v373 = vld [vmem:[#allocation3 + $0x848] sm:$0xff]
    %v374 = vld [vmem:[#allocation3 + $0x850] sm:$0xff]
    %v375 = vld [vmem:[#allocation3 + $0x858] sm:$0xff]
    %v376 = vld [vmem:[#allocation3 + $0x860] sm:$0xff]
    %v377 = vld [vmem:[#allocation3 + $0x868] sm:$0xff]
    %v378 = vld [vmem:[#allocation3 + $0x870] sm:$0xff]
    %v379 = vld [vmem:[#allocation3 + $0x878] sm:$0xff]
    %v380 = vld [vmem:[#allocation3 + $0x880] sm:$0xff]
    %v381 = vld [vmem:[#allocation3 + $0x888] sm:$0xff]
    %v382 = vld [vmem:[#allocation3 + $0x890] sm:$0xff]
    %v383 = vld [vmem:[#allocation3 + $0x898] sm:$0xff]
    %v384 = vld [vmem:[#allocation3 + $0x8a0] sm:$0xff]
    %v385 = vld [vmem:[#allocation3 + $0x8a8] sm:$0xff]
    %v386 = vld [vmem:[#allocation3 + $0x8b0] sm:$0xff]
    %v387 = vld [vmem:[#allocation3 + $0x8b8] sm:$0xff]
    %v388 = vld [vmem:[#allocation3 + $0x8c0] sm:$0xff]
    %v389 = vld [vmem:[#allocation3 + $0x8c8] sm:$0xff]
    %v390 = vld [vmem:[#allocation3 + $0x8d0] sm:$0xff]
    %v391 = vld [vmem:[#allocation3 + $0x8d8] sm:$0xff]
    %v392 = vld [vmem:[#allocation3 + $0x8e0] sm:$0xff]
    %v393 = vld [vmem:[#allocation3 + $0x8e8] sm:$0xff]
    %v394 = vld [vmem:[#allocation3 + $0x8f0] sm:$0xff]
    %v395 = vld [vmem:[#allocation3 + $0x8f8] sm:$0xff]
    %v396 = vld [vmem:[#allocation3 + $0x900] sm:$0xff]
    %v397 = vld [vmem:[#allocation3 + $0x908] sm:$0xff]
    %v398 = vld [vmem:[#allocation3 + $0x910] sm:$0xff]
    %v399 = vld [vmem:[#allocation3 + $0x918] sm:$0xff]
    %v400 = vld [vmem:[#allocation3 + $0x920] sm:$0xff]
    %v401 = vld [vmem:[#allocation3 + $0x928] sm:$0xff]
    %v402 = vld [vmem:[#allocation3 + $0x930] sm:$0xff]
    %v403 = vld [vmem:[#allocation3 + $0x938] sm:$0xff]
    %v404 = vld [vmem:[#allocation3 + $0x940] sm:$0xff]
    %v405 = vld [vmem:[#allocation3 + $0x948] sm:$0xff]
    %v406 = vld [vmem:[#allocation3 + $0x950] sm:$0xff]
    %v407 = vld [vmem:[#allocation3 + $0x958] sm:$0xff]
    %v408 = vld [vmem:[#allocation3 + $0x960] sm:$0xff]
    %v409 = vld [vmem:[#allocation3 + $0x968] sm:$0xff]
    %v410 = vld [vmem:[#allocation3 + $0x970] sm:$0xff]
    %v411 = vld [vmem:[#allocation3 + $0x978] sm:$0xff]
    %v412 = vld [vmem:[#allocation3 + $0x980] sm:$0xff]
    %v413 = vld [vmem:[#allocation3 + $0x988] sm:$0xff]
    %v414 = vld [vmem:[#allocation3 + $0x990] sm:$0xff]
    %v415 = vld [vmem:[#allocation3 + $0x998] sm:$0xff]
    %v416 = vld [vmem:[#allocation3 + $0x9a0] sm:$0xff]
    %v417 = vld [vmem:[#allocation3 + $0x9a8] sm:$0xff]
    %v418 = vld [vmem:[#allocation3 + $0x9b0] sm:$0xff]
    %v419 = vld [vmem:[#allocation3 + $0x9b8] sm:$0xff]
    %v420 = vld [vmem:[#allocation3 + $0x9c0] sm:$0xff]
    %v421 = vld [vmem:[#allocation3 + $0x9c8] sm:$0xff]
    %v422 = vld [vmem:[#allocation3 + $0x9d0] sm:$0xff]
    %v423 = vld [vmem:[#allocation3 + $0x9d8] sm:$0xff]
    %v424 = vld [vmem:[#allocation3 + $0x9e0] sm:$0xff]
    %v425 = vld [vmem:[#allocation3 + $0x9e8] sm:$0xff]
    %v426 = vld [vmem:[#allocation3 + $0x9f0] sm:$0xff]
    %v427 = vld [vmem:[#allocation3 + $0x9f8] sm:$0xff]
    %v428 = vld [vmem:[#allocation3 + $0xa00] sm:$0xff]
    %v429 = vld [vmem:[#allocation3 + $0xa08] sm:$0xff]
    %v430 = vld [vmem:[#allocation3 + $0xa10] sm:$0xff]
    %v431 = vld [vmem:[#allocation3 + $0xa18] sm:$0xff]
    %v432 = vld [vmem:[#allocation3 + $0xa20] sm:$0xff]
    %v433 = vld [vmem:[#allocation3 + $0xa28] sm:$0xff]
    %v434 = vld [vmem:[#allocation3 + $0xa30] sm:$0xff]
    %v435 = vld [vmem:[#allocation3 + $0xa38] sm:$0xff]
    %v436 = vld [vmem:[#allocation3 + $0xa40] sm:$0xff]
    %v437 = vld [vmem:[#allocation3 + $0xa48] sm:$0xff]
    %v438 = vld [vmem:[#allocation3 + $0xa50] sm:$0xff]
    %v439 = vld [vmem:[#allocation3 + $0xa58] sm:$0xff]
    %v440 = vld [vmem:[#allocation3 + $0xa60] sm:$0xff]
    %v441 = vld [vmem:[#allocation3 + $0xa68] sm:$0xff]
    %v442 = vld [vmem:[#allocation3 + $0xa70] sm:$0xff]
    %v443 = vld [vmem:[#allocation3 + $0xa78] sm:$0xff]
    %v444 = vld [vmem:[#allocation3 + $0xa80] sm:$0xff]
    %v445 = vld [vmem:[#allocation3 + $0xa88] sm:$0xff]
    %v446 = vld [vmem:[#allocation3 + $0xa90] sm:$0xff]
    %v447 = vld [vmem:[#allocation3 + $0xa98] sm:$0xff]
    %v448 = vld [vmem:[#allocation3 + $0xaa0] sm:$0xff]
    %v449 = vld [vmem:[#allocation3 + $0xaa8] sm:$0xff]
    %v450 = vld [vmem:[#allocation3 + $0xab0] sm:$0xff]
    %v451 = vld [vmem:[#allocation3 + $0xab8] sm:$0xff]
    %v452 = vld [vmem:[#allocation3 + $0xac0] sm:$0xff]
    %v453 = vld [vmem:[#allocation3 + $0xac8] sm:$0xff]
    %v454 = vld [vmem:[#allocation3 + $0xad0] sm:$0xff]
    %v455 = vld [vmem:[#allocation3 + $0xad8] sm:$0xff]
    %v456 = vld [vmem:[#allocation3 + $0xae0] sm:$0xff]
    %v457 = vld [vmem:[#allocation3 + $0xae8] sm:$0xff]
    %v458 = vld [vmem:[#allocation3 + $0xaf0] sm:$0xff]
    %v459 = vld [vmem:[#allocation3 + $0xaf8] sm:$0xff]
    %v460 = vld [vmem:[#allocation3 + $0xb00] sm:$0xff]
    %v461 = vld [vmem:[#allocation3 + $0xb08] sm:$0xff]
    %v462 = vld [vmem:[#allocation3 + $0xb10] sm:$0xff]
    %v463 = vld [vmem:[#allocation3 + $0xb18] sm:$0xff]
    %v464 = vld [vmem:[#allocation3 + $0xb20] sm:$0xff]
    %v465 = vld [vmem:[#allocation3 + $0xb28] sm:$0xff]
    %v466 = vld [vmem:[#allocation3 + $0xb30] sm:$0xff]
    %v467 = vld [vmem:[#allocation3 + $0xb38] sm:$0xff]
    %v468 = vld [vmem:[#allocation3 + $0xb40] sm:$0xff]
    %v469 = vld [vmem:[#allocation3 + $0xb48] sm:$0xff]
    %v470 = vld [vmem:[#allocation3 + $0xb50] sm:$0xff]
    %v471 = vld [vmem:[#allocation3 + $0xb58] sm:$0xff]
    %v472 = vld [vmem:[#allocation3 + $0xb60] sm:$0xff]
    %v473 = vld [vmem:[#allocation3 + $0xb68] sm:$0xff]
    %v474 = vld [vmem:[#allocation3 + $0xb70] sm:$0xff]
    %v475 = vld [vmem:[#allocation3 + $0xb78] sm:$0xff]
    %v476 = vld [vmem:[#allocation3 + $0xb80] sm:$0xff]
    %v477 = vld [vmem:[#allocation3 + $0xb88] sm:$0xff]
    %v478 = vld [vmem:[#allocation3 + $0xb90] sm:$0xff]
    %v479 = vld [vmem:[#allocation3 + $0xb98] sm:$0xff]
    %v480 = vld [vmem:[#allocation3 + $0xba0] sm:$0xff]
    %v481 = vld [vmem:[#allocation3 + $0xba8] sm:$0xff]
    %v482 = vld [vmem:[#allocation3 + $0xbb0] sm:$0xff]
    %v483 = vld [vmem:[#allocation3 + $0xbb8] sm:$0xff]
    %v484 = vld [vmem:[#allocation3 + $0xbc0] sm:$0xff]
    %v485 = vld [vmem:[#allocation3 + $0xbc8] sm:$0xff]
    %v486 = vld [vmem:[#allocation3 + $0xbd0] sm:$0xff]
    %v487 = vld [vmem:[#allocation3 + $0xbd8] sm:$0xff]
    %v488 = vld [vmem:[#allocation3 + $0xbe0] sm:$0xff]
    %v489 = vld [vmem:[#allocation3 + $0xbe8] sm:$0xff]
    %v490 = vld [vmem:[#allocation3 + $0xbf0] sm:$0xff]
    %v491 = vld [vmem:[#allocation3 + $0xbf8] sm:$0xff]
    %v492 = vld [vmem:[#allocation3 + $0xc00] sm:$0xff]
    %v493 = vld [vmem:[#allocation3 + $0xc08] sm:$0xff]
    %v494 = vld [vmem:[#allocation3 + $0xc10] sm:$0xff]
    %v495 = vld [vmem:[#allocation3 + $0xc18] sm:$0xff]
    %v496 = vld [vmem:[#allocation3 + $0xc20] sm:$0xff]
    %v497 = vld [vmem:[#allocation3 + $0xc28] sm:$0xff]
    %v498 = vld [vmem:[#allocation3 + $0xc30] sm:$0xff]
    %v499 = vld [vmem:[#allocation3 + $0xc38] sm:$0xff]
    %v500 = vld [vmem:[#allocation3 + $0xc40] sm:$0xff]
    %v501 = vld [vmem:[#allocation3 + $0xc48] sm:$0xff]
    %v502 = vld [vmem:[#allocation3 + $0xc50] sm:$0xff]
    %v503 = vld [vmem:[#allocation3 + $0xc58] sm:$0xff]
    %v504 = vld [vmem:[#allocation3 + $0xc60] sm:$0xff]
    %v505 = vld [vmem:[#allocation3 + $0xc68] sm:$0xff]
    %v506 = vld [vmem:[#allocation3 + $0xc70] sm:$0xff]
    %v507 = vld [vmem:[#allocation3 + $0xc78] sm:$0xff]
    %v508 = vld [vmem:[#allocation3 + $0xc80] sm:$0xff]
    %v509 = vld [vmem:[#allocation3 + $0xc88] sm:$0xff]
    %v510 = vld [vmem:[#allocation3 + $0xc90] sm:$0xff]
    %v511 = vld [vmem:[#allocation3 + $0xc98] sm:$0xff]
    %v512 = vld [vmem:[#allocation3 + $0xca0] sm:$0xff]
    %v513 = vld [vmem:[#allocation3 + $0xca8] sm:$0xff]
    %v514 = vld [vmem:[#allocation3 + $0xcb0] sm:$0xff]
    %v515 = vld [vmem:[#allocation3 + $0xcb8] sm:$0xff]
    %v516 = vld [vmem:[#allocation3 + $0xcc0] sm:$0xff]
    %v517 = vld [vmem:[#allocation3 + $0xcc8] sm:$0xff]
    %v518 = vld [vmem:[#allocation3 + $0xcd0] sm:$0xff]
    %v519 = vld [vmem:[#allocation3 + $0xcd8] sm:$0xff]
    %v520 = vld [vmem:[#allocation3 + $0xce0] sm:$0xff]
    %v521 = vld [vmem:[#allocation3 + $0xce8] sm:$0xff]
    %v522 = vld [vmem:[#allocation3 + $0xcf0] sm:$0xff]
    %v523 = vld [vmem:[#allocation3 + $0xcf8] sm:$0xff]
    %v524 = vld [vmem:[#allocation3 + $0xd00] sm:$0xff]
    %v525 = vld [vmem:[#allocation3 + $0xd08] sm:$0xff]
    %v526 = vld [vmem:[#allocation3 + $0xd10] sm:$0xff]
    %v527 = vld [vmem:[#allocation3 + $0xd18] sm:$0xff]
    %v528 = vld [vmem:[#allocation3 + $0xd20] sm:$0xff]
    %v529 = vld [vmem:[#allocation3 + $0xd28] sm:$0xff]
    %v530 = vld [vmem:[#allocation3 + $0xd30] sm:$0xff]
    %v531 = vld [vmem:[#allocation3 + $0xd38] sm:$0xff]
    %v532 = vld [vmem:[#allocation3 + $0xd40] sm:$0xff]
    %v533 = vld [vmem:[#allocation3 + $0xd48] sm:$0xff]
    %v534 = vld [vmem:[#allocation3 + $0xd50] sm:$0xff]
    %v535 = vld [vmem:[#allocation3 + $0xd58] sm:$0xff]
    %v536 = vld [vmem:[#allocation3 + $0xd60] sm:$0xff]
    %v537 = vld [vmem:[#allocation3 + $0xd68] sm:$0xff]
    %v538 = vld [vmem:[#allocation3 + $0xd70] sm:$0xff]
    %v539 = vld [vmem:[#allocation3 + $0xd78] sm:$0xff]
    %v540 = vld [vmem:[#allocation3 + $0xd80] sm:$0xff]
    %v541 = vld [vmem:[#allocation3 + $0xd88] sm:$0xff]
    %v542 = vld [vmem:[#allocation3 + $0xd90] sm:$0xff]
    %v543 = vld [vmem:[#allocation3 + $0xd98] sm:$0xff]
    %v544 = vld [vmem:[#allocation3 + $0xda0] sm:$0xff]
    %v545 = vld [vmem:[#allocation3 + $0xda8] sm:$0xff]
    %v546 = vld [vmem:[#allocation3 + $0xdb0] sm:$0xff]
    %v547 = vld [vmem:[#allocation3 + $0xdb8] sm:$0xff]
    %v548 = vld [vmem:[#allocation3 + $0xdc0] sm:$0xff]
    %v549 = vld [vmem:[#allocation3 + $0xdc8] sm:$0xff]
    %v550 = vld [vmem:[#allocation3 + $0xdd0] sm:$0xff]
    %v551 = vld [vmem:[#allocation3 + $0xdd8] sm:$0xff]
    %v552 = vld [vmem:[#allocation3 + $0xde0] sm:$0xff]
    %v553 = vld [vmem:[#allocation3 + $0xde8] sm:$0xff]
    %v554 = vld [vmem:[#allocation3 + $0xdf0] sm:$0xff]
    %v555 = vld [vmem:[#allocation3 + $0xdf8] sm:$0xff]
    %v556 = vld [vmem:[#allocation3 + $0xe00] sm:$0xff]
    %v557 = vld [vmem:[#allocation3 + $0xe08] sm:$0xff]
    %v558 = vld [vmem:[#allocation3 + $0xe10] sm:$0xff]
    %v559 = vld [vmem:[#allocation3 + $0xe18] sm:$0xff]
    %v560 = vld [vmem:[#allocation3 + $0xe20] sm:$0xff]
    %v561 = vld [vmem:[#allocation3 + $0xe28] sm:$0xff]
    %v562 = vld [vmem:[#allocation3 + $0xe30] sm:$0xff]
    %v563 = vld [vmem:[#allocation3 + $0xe38] sm:$0xff]
    %v564 = vld [vmem:[#allocation3 + $0xe40] sm:$0xff]
    %v565 = vld [vmem:[#allocation3 + $0xe48] sm:$0xff]
    %v566 = vld [vmem:[#allocation3 + $0xe50] sm:$0xff]
    %v567 = vld [vmem:[#allocation3 + $0xe58] sm:$0xff]
    %v568 = vld [vmem:[#allocation3 + $0xe60] sm:$0xff]
    %v569 = vld [vmem:[#allocation3 + $0xe68] sm:$0xff]
    %v570 = vld [vmem:[#allocation3 + $0xe70] sm:$0xff]
    %v571 = vld [vmem:[#allocation3 + $0xe78] sm:$0xff]
    %v572 = vld [vmem:[#allocation3 + $0xe80] sm:$0xff]
    %v573 = vld [vmem:[#allocation3 + $0xe88] sm:$0xff]
    %v574 = vld [vmem:[#allocation3 + $0xe90] sm:$0xff]
    %v575 = vld [vmem:[#allocation3 + $0xe98] sm:$0xff]
    %v576 = vld [vmem:[#allocation3 + $0xea0] sm:$0xff]
    %v577 = vld [vmem:[#allocation3 + $0xea8] sm:$0xff]
    %v578 = vld [vmem:[#allocation3 + $0xeb0] sm:$0xff]
    %v579 = vld [vmem:[#allocation3 + $0xeb8] sm:$0xff]
    %v580 = vld [vmem:[#allocation3 + $0xec0] sm:$0xff]
    %v581 = vld [vmem:[#allocation3 + $0xec8] sm:$0xff]
    %v582 = vld [vmem:[#allocation3 + $0xed0] sm:$0xff]
    %v583 = vld [vmem:[#allocation3 + $0xed8] sm:$0xff]
    %v584 = vld [vmem:[#allocation3 + $0xee0] sm:$0xff]
    %v585 = vld [vmem:[#allocation3 + $0xee8] sm:$0xff]
    %v586 = vld [vmem:[#allocation3 + $0xef0] sm:$0xff]
    %v587 = vld [vmem:[#allocation3 + $0xef8] sm:$0xff]
    %v588 = vld [vmem:[#allocation3 + $0xf00] sm:$0xff]
    %v589 = vld [vmem:[#allocation3 + $0xf08] sm:$0xff]
    %v590 = vld [vmem:[#allocation3 + $0xf10] sm:$0xff]
    %v591 = vld [vmem:[#allocation3 + $0xf18] sm:$0xff]
    %v592 = vld [vmem:[#allocation3 + $0xf20] sm:$0xff]
    %v593 = vld [vmem:[#allocation3 + $0xf28] sm:$0xff]
    %v594 = vld [vmem:[#allocation3 + $0xf30] sm:$0xff]
    %v595 = vld [vmem:[#allocation3 + $0xf38] sm:$0xff]
    %v596 = vld [vmem:[#allocation3 + $0xf40] sm:$0xff]
    %v597 = vld [vmem:[#allocation3 + $0xf48] sm:$0xff]
    %v598 = vld [vmem:[#allocation3 + $0xf50] sm:$0xff]
    %v599 = vld [vmem:[#allocation3 + $0xf58] sm:$0xff]
    %v600 = vld [vmem:[#allocation3 + $0xf60] sm:$0xff]
    %v601 = vld [vmem:[#allocation3 + $0xf68] sm:$0xff]
    %v602 = vld [vmem:[#allocation3 + $0xf70] sm:$0xff]
    %v603 = vld [vmem:[#allocation3 + $0xf78] sm:$0xff]
    %v604 = vld [vmem:[#allocation3 + $0xf80] sm:$0xff]
    %v605 = vld [vmem:[#allocation3 + $0xf88] sm:$0xff]
    %v606 = vld [vmem:[#allocation3 + $0xf90] sm:$0xff]
    %v607 = vld [vmem:[#allocation3 + $0xf98] sm:$0xff]
    %v608 = vld [vmem:[#allocation3 + $0xfa0] sm:$0xff]
    %v609 = vld [vmem:[#allocation3 + $0xfa8] sm:$0xff]
    %v610 = vld [vmem:[#allocation3 + $0xfb0] sm:$0xff]
    %v611 = vld [vmem:[#allocation3 + $0xfb8] sm:$0xff]
    %v612 = vld [vmem:[#allocation3 + $0xfc0] sm:$0xff]
    %v613 = vld [vmem:[#allocation3 + $0xfc8] sm:$0xff]
    %v614 = vld [vmem:[#allocation3 + $0xfd0] sm:$0xff]
    %v615 = vld [vmem:[#allocation3 + $0xfd8] sm:$0xff]
    %v616 = vld [vmem:[#allocation3 + $0xfe0] sm:$0xff]
    %v617 = vld [vmem:[#allocation3 + $0xfe8] sm:$0xff]
    %v618 = vld [vmem:[#allocation3 + $0xff0] sm:$0xff]
    %v619 = vld [vmem:[#allocation3 + $0xff8] sm:$0xff]
    %v620 = vld [vmem:[#allocation5] sm:$0xf]
    %v622 = vperm.slane %v620, 0
    %v623 = vperm.slane %v620, 1
    %v624 = vperm.slane %v620, 2
    %v625 = vperm.slane %v620, 3
    %630 = vmatpush.msra.mxu0 %v168
    %631 = vmatpush.msra.mxu0 %v164
    %632 = vmatpush.msra.mxu0 %v160
    %633 = vmatpush.msra.mxu0 %v156
    %634 = vmatpush.msra.mxu0 %v152
    %635 = vmatpush.msra.mxu0 %v148
    %636 = vmatpush.msra.mxu0 %v144
    %637 = vmatpush.msra.mxu0 %v140
    %638 = vmatpush.msra.mxu0 %v136
    %639 = vmatpush.msra.mxu0 %v132
    %640 = vmatpush.msra.mxu0 %v128
    %641 = vmatpush.msra.mxu0 %v124
    %642 = vmatpush.msra.mxu0 %v120
    %643 = vmatpush.msra.mxu0 %v116
    %644 = vmatpush.msra.mxu0 %v112
    %645 = vmatpush.msra.mxu0 %v108
    %646 = vmatmul.f32.gmra.mxu0 %v100
    %v647 = vpop.f32.mrf.mxu0
    %v648 = vadd.f32 %v622, %v647
    %649 = vdwg.mxu0
    %650 = vmatpush.msra.mxu0 %v232
    %651 = vmatpush.msra.mxu0 %v228
    %652 = vmatpush.msra.mxu0 %v224
    %653 = vmatpush.msra.mxu0 %v220
    %654 = vmatpush.msra.mxu0 %v216
    %655 = vmatpush.msra.mxu0 %v212
    %656 = vmatpush.msra.mxu0 %v208
    %657 = vmatpush.msra.mxu0 %v204
    %658 = vmatpush.msra.mxu0 %v200
    %659 = vmatpush.msra.mxu0 %v196
    %660 = vmatpush.msra.mxu0 %v192
    %661 = vmatpush.msra.mxu0 %v188
    %662 = vmatpush.msra.mxu0 %v184
    %663 = vmatpush.msra.mxu0 %v180
    %664 = vmatpush.msra.mxu0 %v176
    %665 = vmatpush.msra.mxu0 %v172
    %666 = vmatmul.f32.gmra.mxu0 %v101
    %v667 = vpop.f32.mrf.mxu0
    %v668 = vadd.f32 %v648, %v667
    %669 = vdwg.mxu0
    %670 = vmatpush.msra.mxu0 %v296
    %671 = vmatpush.msra.mxu0 %v292
    %672 = vmatpush.msra.mxu0 %v288
    %673 = vmatpush.msra.mxu0 %v284
    %674 = vmatpush.msra.mxu0 %v280
    %675 = vmatpush.msra.mxu0 %v276
    %676 = vmatpush.msra.mxu0 %v272
    %677 = vmatpush.msra.mxu0 %v268
    %678 = vmatpush.msra.mxu0 %v264
    %679 = vmatpush.msra.mxu0 %v260
    %680 = vmatpush.msra.mxu0 %v256
    %681 = vmatpush.msra.mxu0 %v252
    %682 = vmatpush.msra.mxu0 %v248
    %683 = vmatpush.msra.mxu0 %v244
    %684 = vmatpush.msra.mxu0 %v240
    %685 = vmatpush.msra.mxu0 %v236
    %686 = vmatmul.f32.gmra.mxu0 %v102
    %v687 = vpop.f32.mrf.mxu0
    %v688 = vadd.f32 %v668, %v687
    %689 = vdwg.mxu0
    %690 = vmatpush.msra.mxu0 %v360
    %691 = vmatpush.msra.mxu0 %v356
    %692 = vmatpush.msra.mxu0 %v352
    %693 = vmatpush.msra.mxu0 %v348
    %694 = vmatpush.msra.mxu0 %v344
    %695 = vmatpush.msra.mxu0 %v340
    %696 = vmatpush.msra.mxu0 %v336
    %697 = vmatpush.msra.mxu0 %v332
    %698 = vmatpush.msra.mxu0 %v328
    %699 = vmatpush.msra.mxu0 %v324
    %700 = vmatpush.msra.mxu0 %v320
    %701 = vmatpush.msra.mxu0 %v316
    %702 = vmatpush.msra.mxu0 %v312
    %703 = vmatpush.msra.mxu0 %v308
    %704 = vmatpush.msra.mxu0 %v304
    %705 = vmatpush.msra.mxu0 %v300
    %706 = vmatmul.f32.gmra.mxu0 %v103
    %v707 = vpop.f32.mrf.mxu0
    %v708 = vadd.f32 %v688, %v707
    %709 = vdwg.mxu0
    %710 = vmatpush.msra.mxu0 %v424
    %711 = vmatpush.msra.mxu0 %v420
    %712 = vmatpush.msra.mxu0 %v416
    %713 = vmatpush.msra.mxu0 %v412
    %714 = vmatpush.msra.mxu0 %v408
    %715 = vmatpush.msra.mxu0 %v404
    %716 = vmatpush.msra.mxu0 %v400
    %717 = vmatpush.msra.mxu0 %v396
    %718 = vmatpush.msra.mxu0 %v392
    %719 = vmatpush.msra.mxu0 %v388
    %720 = vmatpush.msra.mxu0 %v384
    %721 = vmatpush.msra.mxu0 %v380
    %722 = vmatpush.msra.mxu0 %v376
    %723 = vmatpush.msra.mxu0 %v372
    %724 = vmatpush.msra.mxu0 %v368
    %725 = vmatpush.msra.mxu0 %v364
    %726 = vmatmul.f32.gmra.mxu0 %v104
    %v727 = vpop.f32.mrf.mxu0
    %v728 = vadd.f32 %v708, %v727
    %729 = vdwg.mxu0
    %730 = vmatpush.msra.mxu0 %v488
    %731 = vmatpush.msra.mxu0 %v484
    %732 = vmatpush.msra.mxu0 %v480
    %733 = vmatpush.msra.mxu0 %v476
    %734 = vmatpush.msra.mxu0 %v472
    %735 = vmatpush.msra.mxu0 %v468
    %736 = vmatpush.msra.mxu0 %v464
    %737 = vmatpush.msra.mxu0 %v460
    %738 = vmatpush.msra.mxu0 %v456
    %739 = vmatpush.msra.mxu0 %v452
    %740 = vmatpush.msra.mxu0 %v448
    %741 = vmatpush.msra.mxu0 %v444
    %742 = vmatpush.msra.mxu0 %v440
    %743 = vmatpush.msra.mxu0 %v436
    %744 = vmatpush.msra.mxu0 %v432
    %745 = vmatpush.msra.mxu0 %v428
    %746 = vmatmul.f32.gmra.mxu0 %v105
    %v747 = vpop.f32.mrf.mxu0
    %v748 = vadd.f32 %v728, %v747
    %749 = vdwg.mxu0
    %750 = vmatpush.msra.mxu0 %v552
    %751 = vmatpush.msra.mxu0 %v548
    %752 = vmatpush.msra.mxu0 %v544
    %753 = vmatpush.msra.mxu0 %v540
    %754 = vmatpush.msra.mxu0 %v536
    %755 = vmatpush.msra.mxu0 %v532
    %756 = vmatpush.msra.mxu0 %v528
    %757 = vmatpush.msra.mxu0 %v524
    %758 = vmatpush.msra.mxu0 %v520
    %759 = vmatpush.msra.mxu0 %v516
    %760 = vmatpush.msra.mxu0 %v512
    %761 = vmatpush.msra.mxu0 %v508
    %762 = vmatpush.msra.mxu0 %v504
    %763 = vmatpush.msra.mxu0 %v500
    %764 = vmatpush.msra.mxu0 %v496
    %765 = vmatpush.msra.mxu0 %v492
    %766 = vmatmul.f32.gmra.mxu0 %v106
    %v767 = vpop.f32.mrf.mxu0
    %v768 = vadd.f32 %v748, %v767
    %769 = vdwg.mxu0
    %770 = vmatpush.msra.mxu0 %v616
    %771 = vmatpush.msra.mxu0 %v612
    %772 = vmatpush.msra.mxu0 %v608
    %773 = vmatpush.msra.mxu0 %v604
    %774 = vmatpush.msra.mxu0 %v600
    %775 = vmatpush.msra.mxu0 %v596
    %776 = vmatpush.msra.mxu0 %v592
    %777 = vmatpush.msra.mxu0 %v588
    %778 = vmatpush.msra.mxu0 %v584
    %779 = vmatpush.msra.mxu0 %v580
    %780 = vmatpush.msra.mxu0 %v576
    %781 = vmatpush.msra.mxu0 %v572
    %782 = vmatpush.msra.mxu0 %v568
    %783 = vmatpush.msra.mxu0 %v564
    %784 = vmatpush.msra.mxu0 %v560
    %785 = vmatpush.msra.mxu0 %v556
    %786 = vmatmul.f32.gmra.mxu0 %v107
    %v787 = vpop.f32.mrf.mxu0
    %v788 = vadd.f32 %v768, %v787
    %789 = vdwg.mxu0
    %790 = vmatpush.msra.mxu0 %v169
    %791 = vmatpush.msra.mxu0 %v165
    %792 = vmatpush.msra.mxu0 %v161
    %793 = vmatpush.msra.mxu0 %v157
    %794 = vmatpush.msra.mxu0 %v153
    %795 = vmatpush.msra.mxu0 %v149
    %796 = vmatpush.msra.mxu0 %v145
    %797 = vmatpush.msra.mxu0 %v141
    %798 = vmatpush.msra.mxu0 %v137
    %799 = vmatpush.msra.mxu0 %v133
    %800 = vmatpush.msra.mxu0 %v129
    %801 = vmatpush.msra.mxu0 %v125
    %802 = vmatpush.msra.mxu0 %v121
    %803 = vmatpush.msra.mxu0 %v117
    %804 = vmatpush.msra.mxu0 %v113
    %805 = vmatpush.msra.mxu0 %v109
    %806 = vmatmul.f32.gmra.mxu0 %v100
    %v807 = vpop.f32.mrf.mxu0
    %v808 = vadd.f32 %v623, %v807
    %809 = vdwg.mxu0
    %810 = vmatpush.msra.mxu0 %v233
    %811 = vmatpush.msra.mxu0 %v229
    %812 = vmatpush.msra.mxu0 %v225
    %813 = vmatpush.msra.mxu0 %v221
    %814 = vmatpush.msra.mxu0 %v217
    %815 = vmatpush.msra.mxu0 %v213
    %816 = vmatpush.msra.mxu0 %v209
    %817 = vmatpush.msra.mxu0 %v205
    %818 = vmatpush.msra.mxu0 %v201
    %819 = vmatpush.msra.mxu0 %v197
    %820 = vmatpush.msra.mxu0 %v193
    %821 = vmatpush.msra.mxu0 %v189
    %822 = vmatpush.msra.mxu0 %v185
    %823 = vmatpush.msra.mxu0 %v181
    %824 = vmatpush.msra.mxu0 %v177
    %825 = vmatpush.msra.mxu0 %v173
    %826 = vmatmul.f32.gmra.mxu0 %v101
    %v827 = vpop.f32.mrf.mxu0
    %v828 = vadd.f32 %v808, %v827
    %829 = vdwg.mxu0
    %830 = vmatpush.msra.mxu0 %v297
    %831 = vmatpush.msra.mxu0 %v293
    %832 = vmatpush.msra.mxu0 %v289
    %833 = vmatpush.msra.mxu0 %v285
    %834 = vmatpush.msra.mxu0 %v281
    %835 = vmatpush.msra.mxu0 %v277
    %836 = vmatpush.msra.mxu0 %v273
    %837 = vmatpush.msra.mxu0 %v269
    %838 = vmatpush.msra.mxu0 %v265
    %839 = vmatpush.msra.mxu0 %v261
    %840 = vmatpush.msra.mxu0 %v257
    %841 = vmatpush.msra.mxu0 %v253
    %842 = vmatpush.msra.mxu0 %v249
    %843 = vmatpush.msra.mxu0 %v245
    %844 = vmatpush.msra.mxu0 %v241
    %845 = vmatpush.msra.mxu0 %v237
    %846 = vmatmul.f32.gmra.mxu0 %v102
    %v847 = vpop.f32.mrf.mxu0
    %v848 = vadd.f32 %v828, %v847
    %849 = vdwg.mxu0
    %850 = vmatpush.msra.mxu0 %v361
    %851 = vmatpush.msra.mxu0 %v357
    %852 = vmatpush.msra.mxu0 %v353
    %853 = vmatpush.msra.mxu0 %v349
    %854 = vmatpush.msra.mxu0 %v345
    %855 = vmatpush.msra.mxu0 %v341
    %856 = vmatpush.msra.mxu0 %v337
    %857 = vmatpush.msra.mxu0 %v333
    %858 = vmatpush.msra.mxu0 %v329
    %859 = vmatpush.msra.mxu0 %v325
    %860 = vmatpush.msra.mxu0 %v321
    %861 = vmatpush.msra.mxu0 %v317
    %862 = vmatpush.msra.mxu0 %v313
    %863 = vmatpush.msra.mxu0 %v309
    %864 = vmatpush.msra.mxu0 %v305
    %865 = vmatpush.msra.mxu0 %v301
    %866 = vmatmul.f32.gmra.mxu0 %v103
    %v867 = vpop.f32.mrf.mxu0
    %v868 = vadd.f32 %v848, %v867
    %869 = vdwg.mxu0
    %870 = vmatpush.msra.mxu0 %v425
    %871 = vmatpush.msra.mxu0 %v421
    %872 = vmatpush.msra.mxu0 %v417
    %873 = vmatpush.msra.mxu0 %v413
    %874 = vmatpush.msra.mxu0 %v409
    %875 = vmatpush.msra.mxu0 %v405
    %876 = vmatpush.msra.mxu0 %v401
    %877 = vmatpush.msra.mxu0 %v397
    %878 = vmatpush.msra.mxu0 %v393
    %879 = vmatpush.msra.mxu0 %v389
    %880 = vmatpush.msra.mxu0 %v385
    %881 = vmatpush.msra.mxu0 %v381
    %882 = vmatpush.msra.mxu0 %v377
    %883 = vmatpush.msra.mxu0 %v373
    %884 = vmatpush.msra.mxu0 %v369
    %885 = vmatpush.msra.mxu0 %v365
    %886 = vmatmul.f32.gmra.mxu0 %v104
    %v887 = vpop.f32.mrf.mxu0
    %v888 = vadd.f32 %v868, %v887
    %889 = vdwg.mxu0
    %890 = vmatpush.msra.mxu0 %v489
    %891 = vmatpush.msra.mxu0 %v485
    %892 = vmatpush.msra.mxu0 %v481
    %893 = vmatpush.msra.mxu0 %v477
    %894 = vmatpush.msra.mxu0 %v473
    %895 = vmatpush.msra.mxu0 %v469
    %896 = vmatpush.msra.mxu0 %v465
    %897 = vmatpush.msra.mxu0 %v461
    %898 = vmatpush.msra.mxu0 %v457
    %899 = vmatpush.msra.mxu0 %v453
    %900 = vmatpush.msra.mxu0 %v449
    %901 = vmatpush.msra.mxu0 %v445
    %902 = vmatpush.msra.mxu0 %v441
    %903 = vmatpush.msra.mxu0 %v437
    %904 = vmatpush.msra.mxu0 %v433
    %905 = vmatpush.msra.mxu0 %v429
    %906 = vmatmul.f32.gmra.mxu0 %v105
    %v907 = vpop.f32.mrf.mxu0
    %v908 = vadd.f32 %v888, %v907
    %909 = vdwg.mxu0
    %910 = vmatpush.msra.mxu0 %v553
    %911 = vmatpush.msra.mxu0 %v549
    %912 = vmatpush.msra.mxu0 %v545
    %913 = vmatpush.msra.mxu0 %v541
    %914 = vmatpush.msra.mxu0 %v537
    %915 = vmatpush.msra.mxu0 %v533
    %916 = vmatpush.msra.mxu0 %v529
    %917 = vmatpush.msra.mxu0 %v525
    %918 = vmatpush.msra.mxu0 %v521
    %919 = vmatpush.msra.mxu0 %v517
    %920 = vmatpush.msra.mxu0 %v513
    %921 = vmatpush.msra.mxu0 %v509
    %922 = vmatpush.msra.mxu0 %v505
    %923 = vmatpush.msra.mxu0 %v501
    %924 = vmatpush.msra.mxu0 %v497
    %925 = vmatpush.msra.mxu0 %v493
    %926 = vmatmul.f32.gmra.mxu0 %v106
    %v927 = vpop.f32.mrf.mxu0
    %v928 = vadd.f32 %v908, %v927
    %929 = vdwg.mxu0
    %930 = vmatpush.msra.mxu0 %v617
    %931 = vmatpush.msra.mxu0 %v613
    %932 = vmatpush.msra.mxu0 %v609
    %933 = vmatpush.msra.mxu0 %v605
    %934 = vmatpush.msra.mxu0 %v601
    %935 = vmatpush.msra.mxu0 %v597
    %936 = vmatpush.msra.mxu0 %v593
    %937 = vmatpush.msra.mxu0 %v589
    %938 = vmatpush.msra.mxu0 %v585
    %939 = vmatpush.msra.mxu0 %v581
    %940 = vmatpush.msra.mxu0 %v577
    %941 = vmatpush.msra.mxu0 %v573
    %942 = vmatpush.msra.mxu0 %v569
    %943 = vmatpush.msra.mxu0 %v565
    %944 = vmatpush.msra.mxu0 %v561
    %945 = vmatpush.msra.mxu0 %v557
    %946 = vmatmul.f32.gmra.mxu0 %v107
    %v947 = vpop.f32.mrf.mxu0
    %v948 = vadd.f32 %v928, %v947
    %949 = vdwg.mxu0
    %950 = vmatpush.msra.mxu0 %v170
    %951 = vmatpush.msra.mxu0 %v166
    %952 = vmatpush.msra.mxu0 %v162
    %953 = vmatpush.msra.mxu0 %v158
    %954 = vmatpush.msra.mxu0 %v154
    %955 = vmatpush.msra.mxu0 %v150
    %956 = vmatpush.msra.mxu0 %v146
    %957 = vmatpush.msra.mxu0 %v142
    %958 = vmatpush.msra.mxu0 %v138
    %959 = vmatpush.msra.mxu0 %v134
    %960 = vmatpush.msra.mxu0 %v130
    %961 = vmatpush.msra.mxu0 %v126
    %962 = vmatpush.msra.mxu0 %v122
    %963 = vmatpush.msra.mxu0 %v118
    %964 = vmatpush.msra.mxu0 %v114
    %965 = vmatpush.msra.mxu0 %v110
    %966 = vmatmul.f32.gmra.mxu0 %v100
    %v967 = vpop.f32.mrf.mxu0
    %v968 = vadd.f32 %v624, %v967
    %969 = vdwg.mxu0
    %970 = vmatpush.msra.mxu0 %v234
    %971 = vmatpush.msra.mxu0 %v230
    %972 = vmatpush.msra.mxu0 %v226
    %973 = vmatpush.msra.mxu0 %v222
    %974 = vmatpush.msra.mxu0 %v218
    %975 = vmatpush.msra.mxu0 %v214
    %976 = vmatpush.msra.mxu0 %v210
    %977 = vmatpush.msra.mxu0 %v206
    %978 = vmatpush.msra.mxu0 %v202
    %979 = vmatpush.msra.mxu0 %v198
    %980 = vmatpush.msra.mxu0 %v194
    %981 = vmatpush.msra.mxu0 %v190
    %982 = vmatpush.msra.mxu0 %v186
    %983 = vmatpush.msra.mxu0 %v182
    %984 = vmatpush.msra.mxu0 %v178
    %985 = vmatpush.msra.mxu0 %v174
    %986 = vmatmul.f32.gmra.mxu0 %v101
    %v987 = vpop.f32.mrf.mxu0
    %v988 = vadd.f32 %v968, %v987
    %989 = vdwg.mxu0
    %990 = vmatpush.msra.mxu0 %v298
    %991 = vmatpush.msra.mxu0 %v294
    %992 = vmatpush.msra.mxu0 %v290
    %993 = vmatpush.msra.mxu0 %v286
    %994 = vmatpush.msra.mxu0 %v282
    %995 = vmatpush.msra.mxu0 %v278
    %996 = vmatpush.msra.mxu0 %v274
    %997 = vmatpush.msra.mxu0 %v270
    %998 = vmatpush.msra.mxu0 %v266
    %999 = vmatpush.msra.mxu0 %v262
    %1000 = vmatpush.msra.mxu0 %v258
    %1001 = vmatpush.msra.mxu0 %v254
    %1002 = vmatpush.msra.mxu0 %v250
    %1003 = vmatpush.msra.mxu0 %v246
    %1004 = vmatpush.msra.mxu0 %v242
    %1005 = vmatpush.msra.mxu0 %v238
    %1006 = vmatmul.f32.gmra.mxu0 %v102
    %v1007 = vpop.f32.mrf.mxu0
    %v1008 = vadd.f32 %v988, %v1007
    %1009 = vdwg.mxu0
    %1010 = vmatpush.msra.mxu0 %v362
    %1011 = vmatpush.msra.mxu0 %v358
    %1012 = vmatpush.msra.mxu0 %v354
    %1013 = vmatpush.msra.mxu0 %v350
    %1014 = vmatpush.msra.mxu0 %v346
    %1015 = vmatpush.msra.mxu0 %v342
    %1016 = vmatpush.msra.mxu0 %v338
    %1017 = vmatpush.msra.mxu0 %v334
    %1018 = vmatpush.msra.mxu0 %v330
    %1019 = vmatpush.msra.mxu0 %v326
    %1020 = vmatpush.msra.mxu0 %v322
    %1021 = vmatpush.msra.mxu0 %v318
    %1022 = vmatpush.msra.mxu0 %v314
    %1023 = vmatpush.msra.mxu0 %v310
    %1024 = vmatpush.msra.mxu0 %v306
    %1025 = vmatpush.msra.mxu0 %v302
    %1026 = vmatmul.f32.gmra.mxu0 %v103
    %v1027 = vpop.f32.mrf.mxu0
    %v1028 = vadd.f32 %v1008, %v1027
    %1029 = vdwg.mxu0
    %1030 = vmatpush.msra.mxu0 %v426
    %1031 = vmatpush.msra.mxu0 %v422
    %1032 = vmatpush.msra.mxu0 %v418
    %1033 = vmatpush.msra.mxu0 %v414
    %1034 = vmatpush.msra.mxu0 %v410
    %1035 = vmatpush.msra.mxu0 %v406
    %1036 = vmatpush.msra.mxu0 %v402
    %1037 = vmatpush.msra.mxu0 %v398
    %1038 = vmatpush.msra.mxu0 %v394
    %1039 = vmatpush.msra.mxu0 %v390
    %1040 = vmatpush.msra.mxu0 %v386
    %1041 = vmatpush.msra.mxu0 %v382
    %1042 = vmatpush.msra.mxu0 %v378
    %1043 = vmatpush.msra.mxu0 %v374
    %1044 = vmatpush.msra.mxu0 %v370
    %1045 = vmatpush.msra.mxu0 %v366
    %1046 = vmatmul.f32.gmra.mxu0 %v104
    %v1047 = vpop.f32.mrf.mxu0
    %v1048 = vadd.f32 %v1028, %v1047
    %1049 = vdwg.mxu0
    %1050 = vmatpush.msra.mxu0 %v490
    %1051 = vmatpush.msra.mxu0 %v486
    %1052 = vmatpush.msra.mxu0 %v482
    %1053 = vmatpush.msra.mxu0 %v478
    %1054 = vmatpush.msra.mxu0 %v474
    %1055 = vmatpush.msra.mxu0 %v470
    %1056 = vmatpush.msra.mxu0 %v466
    %1057 = vmatpush.msra.mxu0 %v462
    %1058 = vmatpush.msra.mxu0 %v458
    %1059 = vmatpush.msra.mxu0 %v454
    %1060 = vmatpush.msra.mxu0 %v450
    %1061 = vmatpush.msra.mxu0 %v446
    %1062 = vmatpush.msra.mxu0 %v442
    %1063 = vmatpush.msra.mxu0 %v438
    %1064 = vmatpush.msra.mxu0 %v434
    %1065 = vmatpush.msra.mxu0 %v430
    %1066 = vmatmul.f32.gmra.mxu0 %v105
    %v1067 = vpop.f32.mrf.mxu0
    %v1068 = vadd.f32 %v1048, %v1067
    %1069 = vdwg.mxu0
    %1070 = vmatpush.msra.mxu0 %v554
    %1071 = vmatpush.msra.mxu0 %v550
    %1072 = vmatpush.msra.mxu0 %v546
    %1073 = vmatpush.msra.mxu0 %v542
    %1074 = vmatpush.msra.mxu0 %v538
    %1075 = vmatpush.msra.mxu0 %v534
    %1076 = vmatpush.msra.mxu0 %v530
    %1077 = vmatpush.msra.mxu0 %v526
    %1078 = vmatpush.msra.mxu0 %v522
    %1079 = vmatpush.msra.mxu0 %v518
    %1080 = vmatpush.msra.mxu0 %v514
    %1081 = vmatpush.msra.mxu0 %v510
    %1082 = vmatpush.msra.mxu0 %v506
    %1083 = vmatpush.msra.mxu0 %v502
    %1084 = vmatpush.msra.mxu0 %v498
    %1085 = vmatpush.msra.mxu0 %v494
    %1086 = vmatmul.f32.gmra.mxu0 %v106
    %v1087 = vpop.f32.mrf.mxu0
    %v1088 = vadd.f32 %v1068, %v1087
    %1089 = vdwg.mxu0
    %1090 = vmatpush.msra.mxu0 %v618
    %1091 = vmatpush.msra.mxu0 %v614
    %1092 = vmatpush.msra.mxu0 %v610
    %1093 = vmatpush.msra.mxu0 %v606
    %1094 = vmatpush.msra.mxu0 %v602
    %1095 = vmatpush.msra.mxu0 %v598
    %1096 = vmatpush.msra.mxu0 %v594
    %1097 = vmatpush.msra.mxu0 %v590
    %1098 = vmatpush.msra.mxu0 %v586
    %1099 = vmatpush.msra.mxu0 %v582
    %1100 = vmatpush.msra.mxu0 %v578
    %1101 = vmatpush.msra.mxu0 %v574
    %1102 = vmatpush.msra.mxu0 %v570
    %1103 = vmatpush.msra.mxu0 %v566
    %1104 = vmatpush.msra.mxu0 %v562
    %1105 = vmatpush.msra.mxu0 %v558
    %1106 = vmatmul.f32.gmra.mxu0 %v107
    %v1107 = vpop.f32.mrf.mxu0
    %v1108 = vadd.f32 %v1088, %v1107
    %1109 = vdwg.mxu0
    %1110 = vmatpush.msra.mxu0 %v171
    %1111 = vmatpush.msra.mxu0 %v167
    %1112 = vmatpush.msra.mxu0 %v163
    %1113 = vmatpush.msra.mxu0 %v159
    %1114 = vmatpush.msra.mxu0 %v155
    %1115 = vmatpush.msra.mxu0 %v151
    %1116 = vmatpush.msra.mxu0 %v147
    %1117 = vmatpush.msra.mxu0 %v143
    %1118 = vmatpush.msra.mxu0 %v139
    %1119 = vmatpush.msra.mxu0 %v135
    %1120 = vmatpush.msra.mxu0 %v131
    %1121 = vmatpush.msra.mxu0 %v127
    %1122 = vmatpush.msra.mxu0 %v123
    %1123 = vmatpush.msra.mxu0 %v119
    %1124 = vmatpush.msra.mxu0 %v115
    %1125 = vmatpush.msra.mxu0 %v111
    %1126 = vmatmul.f32.gmra.mxu0 %v100
    %v1127 = vpop.f32.mrf.mxu0
    %v1128 = vadd.f32 %v625, %v1127
    %1129 = vdwg.mxu0
    %1130 = vmatpush.msra.mxu0 %v235
    %1131 = vmatpush.msra.mxu0 %v231
    %1132 = vmatpush.msra.mxu0 %v227
    %1133 = vmatpush.msra.mxu0 %v223
    %1134 = vmatpush.msra.mxu0 %v219
    %1135 = vmatpush.msra.mxu0 %v215
    %1136 = vmatpush.msra.mxu0 %v211
    %1137 = vmatpush.msra.mxu0 %v207
    %1138 = vmatpush.msra.mxu0 %v203
    %1139 = vmatpush.msra.mxu0 %v199
    %1140 = vmatpush.msra.mxu0 %v195
    %1141 = vmatpush.msra.mxu0 %v191
    %1142 = vmatpush.msra.mxu0 %v187
    %1143 = vmatpush.msra.mxu0 %v183
    %1144 = vmatpush.msra.mxu0 %v179
    %1145 = vmatpush.msra.mxu0 %v175
    %1146 = vmatmul.f32.gmra.mxu0 %v101
    %v1147 = vpop.f32.mrf.mxu0
    %v1148 = vadd.f32 %v1128, %v1147
    %1149 = vdwg.mxu0
    %1150 = vmatpush.msra.mxu0 %v299
    %1151 = vmatpush.msra.mxu0 %v295
    %1152 = vmatpush.msra.mxu0 %v291
    %1153 = vmatpush.msra.mxu0 %v287
    %1154 = vmatpush.msra.mxu0 %v283
    %1155 = vmatpush.msra.mxu0 %v279
    %1156 = vmatpush.msra.mxu0 %v275
    %1157 = vmatpush.msra.mxu0 %v271
    %1158 = vmatpush.msra.mxu0 %v267
    %1159 = vmatpush.msra.mxu0 %v263
    %1160 = vmatpush.msra.mxu0 %v259
    %1161 = vmatpush.msra.mxu0 %v255
    %1162 = vmatpush.msra.mxu0 %v251
    %1163 = vmatpush.msra.mxu0 %v247
    %1164 = vmatpush.msra.mxu0 %v243
    %1165 = vmatpush.msra.mxu0 %v239
    %1166 = vmatmul.f32.gmra.mxu0 %v102
    %v1167 = vpop.f32.mrf.mxu0
    %v1168 = vadd.f32 %v1148, %v1167
    %1169 = vdwg.mxu0
    %1170 = vmatpush.msra.mxu0 %v363
    %1171 = vmatpush.msra.mxu0 %v359
    %1172 = vmatpush.msra.mxu0 %v355
    %1173 = vmatpush.msra.mxu0 %v351
    %1174 = vmatpush.msra.mxu0 %v347
    %1175 = vmatpush.msra.mxu0 %v343
    %1176 = vmatpush.msra.mxu0 %v339
    %1177 = vmatpush.msra.mxu0 %v335
    %1178 = vmatpush.msra.mxu0 %v331
    %1179 = vmatpush.msra.mxu0 %v327
    %1180 = vmatpush.msra.mxu0 %v323
    %1181 = vmatpush.msra.mxu0 %v319
    %1182 = vmatpush.msra.mxu0 %v315
    %1183 = vmatpush.msra.mxu0 %v311
    %1184 = vmatpush.msra.mxu0 %v307
    %1185 = vmatpush.msra.mxu0 %v303
    %1186 = vmatmul.f32.gmra.mxu0 %v103
    %v1187 = vpop.f32.mrf.mxu0
    %v1188 = vadd.f32 %v1168, %v1187
    %1189 = vdwg.mxu0
    %1190 = vmatpush.msra.mxu0 %v427
    %1191 = vmatpush.msra.mxu0 %v423
    %1192 = vmatpush.msra.mxu0 %v419
    %1193 = vmatpush.msra.mxu0 %v415
    %1194 = vmatpush.msra.mxu0 %v411
    %1195 = vmatpush.msra.mxu0 %v407
    %1196 = vmatpush.msra.mxu0 %v403
    %1197 = vmatpush.msra.mxu0 %v399
    %1198 = vmatpush.msra.mxu0 %v395
    %1199 = vmatpush.msra.mxu0 %v391
    %1200 = vmatpush.msra.mxu0 %v387
    %1201 = vmatpush.msra.mxu0 %v383
    %1202 = vmatpush.msra.mxu0 %v379
    %1203 = vmatpush.msra.mxu0 %v375
    %1204 = vmatpush.msra.mxu0 %v371
    %1205 = vmatpush.msra.mxu0 %v367
    %1206 = vmatmul.f32.gmra.mxu0 %v104
    %v1207 = vpop.f32.mrf.mxu0
    %v1208 = vadd.f32 %v1188, %v1207
    %1209 = vdwg.mxu0
    %1210 = vmatpush.msra.mxu0 %v491
    %1211 = vmatpush.msra.mxu0 %v487
    %1212 = vmatpush.msra.mxu0 %v483
    %1213 = vmatpush.msra.mxu0 %v479
    %1214 = vmatpush.msra.mxu0 %v475
    %1215 = vmatpush.msra.mxu0 %v471
    %1216 = vmatpush.msra.mxu0 %v467
    %1217 = vmatpush.msra.mxu0 %v463
    %1218 = vmatpush.msra.mxu0 %v459
    %1219 = vmatpush.msra.mxu0 %v455
    %1220 = vmatpush.msra.mxu0 %v451
    %1221 = vmatpush.msra.mxu0 %v447
    %1222 = vmatpush.msra.mxu0 %v443
    %1223 = vmatpush.msra.mxu0 %v439
    %1224 = vmatpush.msra.mxu0 %v435
    %1225 = vmatpush.msra.mxu0 %v431
    %1226 = vmatmul.f32.gmra.mxu0 %v105
    %v1227 = vpop.f32.mrf.mxu0
    %v1228 = vadd.f32 %v1208, %v1227
    %1229 = vdwg.mxu0
    %1230 = vmatpush.msra.mxu0 %v555
    %1231 = vmatpush.msra.mxu0 %v551
    %1232 = vmatpush.msra.mxu0 %v547
    %1233 = vmatpush.msra.mxu0 %v543
    %1234 = vmatpush.msra.mxu0 %v539
    %1235 = vmatpush.msra.mxu0 %v535
    %1236 = vmatpush.msra.mxu0 %v531
    %1237 = vmatpush.msra.mxu0 %v527
    %1238 = vmatpush.msra.mxu0 %v523
    %1239 = vmatpush.msra.mxu0 %v519
    %1240 = vmatpush.msra.mxu0 %v515
    %1241 = vmatpush.msra.mxu0 %v511
    %1242 = vmatpush.msra.mxu0 %v507
    %1243 = vmatpush.msra.mxu0 %v503
    %1244 = vmatpush.msra.mxu0 %v499
    %1245 = vmatpush.msra.mxu0 %v495
    %1246 = vmatmul.f32.gmra.mxu0 %v106
    %v1247 = vpop.f32.mrf.mxu0
    %v1248 = vadd.f32 %v1228, %v1247
    %1249 = vdwg.mxu0
    %1250 = vmatpush.msra.mxu0 %v619
    %1251 = vmatpush.msra.mxu0 %v615
    %1252 = vmatpush.msra.mxu0 %v611
    %1253 = vmatpush.msra.mxu0 %v607
    %1254 = vmatpush.msra.mxu0 %v603
    %1255 = vmatpush.msra.mxu0 %v599
    %1256 = vmatpush.msra.mxu0 %v595
    %1257 = vmatpush.msra.mxu0 %v591
    %1258 = vmatpush.msra.mxu0 %v587
    %1259 = vmatpush.msra.mxu0 %v583
    %1260 = vmatpush.msra.mxu0 %v579
    %1261 = vmatpush.msra.mxu0 %v575
    %1262 = vmatpush.msra.mxu0 %v571
    %1263 = vmatpush.msra.mxu0 %v567
    %1264 = vmatpush.msra.mxu0 %v563
    %1265 = vmatpush.msra.mxu0 %v559
    %1266 = vmatmul.f32.gmra.mxu0 %v107
    %v1267 = vpop.f32.mrf.mxu0
    %v1268 = vadd.f32 %v1248, %v1267
    %1269 = vdwg.mxu0
    %v1270 = vmax.f32 %v788, 0.0
    %v1271 = vmax.f32 %v948, 0.0
    %v1272 = vmax.f32 %v1108, 0.0
    %v1273 = vmax.f32 %v1268, 0.0
    %v1274 = vld [vmem:[#allocation7] sm:$0xff]
    %v1275 = vld [vmem:[#allocation7 + $0x8] sm:$0xff]
    %v1276 = vld [vmem:[#allocation7 + $0x10] sm:$0xff]
    %v1277 = vld [vmem:[#allocation7 + $0x18] sm:$0xff]
    %v1278 = vld [vmem:[#allocation7 + $0x20] sm:$0xff]
    %v1279 = vld [vmem:[#allocation7 + $0x28] sm:$0xff]
    %v1280 = vld [vmem:[#allocation7 + $0x30] sm:$0xff]
    %v1281 = vld [vmem:[#allocation7 + $0x38] sm:$0xff]
    %v1282 = vld [vmem:[#allocation7 + $0x40] sm:$0xff]
    %v1283 = vld [vmem:[#allocation7 + $0x48] sm:$0xff]
    %v1284 = vld [vmem:[#allocation7 + $0x50] sm:$0xff]
    %v1285 = vld [vmem:[#allocation7 + $0x58] sm:$0xff]
    %v1286 = vld [vmem:[#allocation7 + $0x60] sm:$0xff]
    %v1287 = vld [vmem:[#allocation7 + $0x68] sm:$0xff]
    %v1288 = vld [vmem:[#allocation7 + $0x70] sm:$0xff]
    %v1289 = vld [vmem:[#allocation7 + $0x78] sm:$0xff]
    %v1290 = vld [vmem:[#allocation7 + $0x80] sm:$0xff]
    %v1291 = vld [vmem:[#allocation7 + $0x88] sm:$0xff]
    %v1292 = vld [vmem:[#allocation7 + $0x90] sm:$0xff]
    %v1293 = vld [vmem:[#allocation7 + $0x98] sm:$0xff]
    %v1294 = vld [vmem:[#allocation7 + $0xa0] sm:$0xff]
    %v1295 = vld [vmem:[#allocation7 + $0xa8] sm:$0xff]
    %v1296 = vld [vmem:[#allocation7 + $0xb0] sm:$0xff]
    %v1297 = vld [vmem:[#allocation7 + $0xb8] sm:$0xff]
    %v1298 = vld [vmem:[#allocation7 + $0xc0] sm:$0xff]
    %v1299 = vld [vmem:[#allocation7 + $0xc8] sm:$0xff]
    %v1300 = vld [vmem:[#allocation7 + $0xd0] sm:$0xff]
    %v1301 = vld [vmem:[#allocation7 + $0xd8] sm:$0xff]
    %v1302 = vld [vmem:[#allocation7 + $0xe0] sm:$0xff]
    %v1303 = vld [vmem:[#allocation7 + $0xe8] sm:$0xff]
    %v1304 = vld [vmem:[#allocation7 + $0xf0] sm:$0xff]
    %v1305 = vld [vmem:[#allocation7 + $0xf8] sm:$0xff]
    %v1306 = vld [vmem:[#allocation7 + $0x100] sm:$0xff]
    %v1307 = vld [vmem:[#allocation7 + $0x108] sm:$0xff]
    %v1308 = vld [vmem:[#allocation7 + $0x110] sm:$0xff]
    %v1309 = vld [vmem:[#allocation7 + $0x118] sm:$0xff]
    %v1310 = vld [vmem:[#allocation7 + $0x120] sm:$0xff]
    %v1311 = vld [vmem:[#allocation7 + $0x128] sm:$0xff]
    %v1312 = vld [vmem:[#allocation7 + $0x130] sm:$0xff]
    %v1313 = vld [vmem:[#allocation7 + $0x138] sm:$0xff]
    %v1314 = vld [vmem:[#allocation7 + $0x140] sm:$0xff]
    %v1315 = vld [vmem:[#allocation7 + $0x148] sm:$0xff]
    %v1316 = vld [vmem:[#allocation7 + $0x150] sm:$0xff]
    %v1317 = vld [vmem:[#allocation7 + $0x158] sm:$0xff]
    %v1318 = vld [vmem:[#allocation7 + $0x160] sm:$0xff]
    %v1319 = vld [vmem:[#allocation7 + $0x168] sm:$0xff]
    %v1320 = vld [vmem:[#allocation7 + $0x170] sm:$0xff]
    %v1321 = vld [vmem:[#allocation7 + $0x178] sm:$0xff]
    %v1322 = vld [vmem:[#allocation7 + $0x180] sm:$0xff]
    %v1323 = vld [vmem:[#allocation7 + $0x188] sm:$0xff]
    %v1324 = vld [vmem:[#allocation7 + $0x190] sm:$0xff]
    %v1325 = vld [vmem:[#allocation7 + $0x198] sm:$0xff]
    %v1326 = vld [vmem:[#allocation7 + $0x1a0] sm:$0xff]
    %v1327 = vld [vmem:[#allocation7 + $0x1a8] sm:$0xff]
    %v1328 = vld [vmem:[#allocation7 + $0x1b0] sm:$0xff]
    %v1329 = vld [vmem:[#allocation7 + $0x1b8] sm:$0xff]
    %v1330 = vld [vmem:[#allocation7 + $0x1c0] sm:$0xff]
    %v1331 = vld [vmem:[#allocation7 + $0x1c8] sm:$0xff]
    %v1332 = vld [vmem:[#allocation7 + $0x1d0] sm:$0xff]
    %v1333 = vld [vmem:[#allocation7 + $0x1d8] sm:$0xff]
    %v1334 = vld [vmem:[#allocation7 + $0x1e0] sm:$0xff]
    %v1335 = vld [vmem:[#allocation7 + $0x1e8] sm:$0xff]
    %v1336 = vld [vmem:[#allocation7 + $0x1f0] sm:$0xff]
    %v1337 = vld [vmem:[#allocation7 + $0x1f8] sm:$0xff]
    %v1338 = vld [vmem:[#allocation7 + $0x200] sm:$0xff]
    %v1339 = vld [vmem:[#allocation7 + $0x208] sm:$0xff]
    %v1340 = vld [vmem:[#allocation7 + $0x210] sm:$0xff]
    %v1341 = vld [vmem:[#allocation7 + $0x218] sm:$0xff]
    %v1342 = vld [vmem:[#allocation7 + $0x220] sm:$0xff]
    %v1343 = vld [vmem:[#allocation7 + $0x228] sm:$0xff]
    %v1344 = vld [vmem:[#allocation7 + $0x230] sm:$0xff]
    %v1345 = vld [vmem:[#allocation7 + $0x238] sm:$0xff]
    %v1346 = vld [vmem:[#allocation7 + $0x240] sm:$0xff]
    %v1347 = vld [vmem:[#allocation7 + $0x248] sm:$0xff]
    %v1348 = vld [vmem:[#allocation7 + $0x250] sm:$0xff]
    %v1349 = vld [vmem:[#allocation7 + $0x258] sm:$0xff]
    %v1350 = vld [vmem:[#allocation7 + $0x260] sm:$0xff]
    %v1351 = vld [vmem:[#allocation7 + $0x268] sm:$0xff]
    %v1352 = vld [vmem:[#allocation7 + $0x270] sm:$0xff]
    %v1353 = vld [vmem:[#allocation7 + $0x278] sm:$0xff]
    %v1354 = vld [vmem:[#allocation7 + $0x280] sm:$0xff]
    %v1355 = vld [vmem:[#allocation7 + $0x288] sm:$0xff]
    %v1356 = vld [vmem:[#allocation7 + $0x290] sm:$0xff]
    %v1357 = vld [vmem:[#allocation7 + $0x298] sm:$0xff]
    %v1358 = vld [vmem:[#allocation7 + $0x2a0] sm:$0xff]
    %v1359 = vld [vmem:[#allocation7 + $0x2a8] sm:$0xff]
    %v1360 = vld [vmem:[#allocation7 + $0x2b0] sm:$0xff]
    %v1361 = vld [vmem:[#allocation7 + $0x2b8] sm:$0xff]
    %v1362 = vld [vmem:[#allocation7 + $0x2c0] sm:$0xff]
    %v1363 = vld [vmem:[#allocation7 + $0x2c8] sm:$0xff]
    %v1364 = vld [vmem:[#allocation7 + $0x2d0] sm:$0xff]
    %v1365 = vld [vmem:[#allocation7 + $0x2d8] sm:$0xff]
    %v1366 = vld [vmem:[#allocation7 + $0x2e0] sm:$0xff]
    %v1367 = vld [vmem:[#allocation7 + $0x2e8] sm:$0xff]
    %v1368 = vld [vmem:[#allocation7 + $0x2f0] sm:$0xff]
    %v1369 = vld [vmem:[#allocation7 + $0x2f8] sm:$0xff]
    %v1370 = vld [vmem:[#allocation7 + $0x300] sm:$0xff]
    %v1371 = vld [vmem:[#allocation7 + $0x308] sm:$0xff]
    %v1372 = vld [vmem:[#allocation7 + $0x310] sm:$0xff]
    %v1373 = vld [vmem:[#allocation7 + $0x318] sm:$0xff]
    %v1374 = vld [vmem:[#allocation7 + $0x320] sm:$0xff]
    %v1375 = vld [vmem:[#allocation7 + $0x328] sm:$0xff]
    %v1376 = vld [vmem:[#allocation7 + $0x330] sm:$0xff]
    %v1377 = vld [vmem:[#allocation7 + $0x338] sm:$0xff]
    %v1378 = vld [vmem:[#allocation7 + $0x340] sm:$0xff]
    %v1379 = vld [vmem:[#allocation7 + $0x348] sm:$0xff]
    %v1380 = vld [vmem:[#allocation7 + $0x350] sm:$0xff]
    %v1381 = vld [vmem:[#allocation7 + $0x358] sm:$0xff]
    %v1382 = vld [vmem:[#allocation7 + $0x360] sm:$0xff]
    %v1383 = vld [vmem:[#allocation7 + $0x368] sm:$0xff]
    %v1384 = vld [vmem:[#allocation7 + $0x370] sm:$0xff]
    %v1385 = vld [vmem:[#allocation7 + $0x378] sm:$0xff]
    %v1386 = vld [vmem:[#allocation7 + $0x380] sm:$0xff]
    %v1387 = vld [vmem:[#allocation7 + $0x388] sm:$0xff]
    %v1388 = vld [vmem:[#allocation7 + $0x390] sm:$0xff]
    %v1389 = vld [vmem:[#allocation7 + $0x398] sm:$0xff]
    %v1390 = vld [vmem:[#allocation7 + $0x3a0] sm:$0xff]
    %v1391 = vld [vmem:[#allocation7 + $0x3a8] sm:$0xff]
    %v1392 = vld [vmem:[#allocation7 + $0x3b0] sm:$0xff]
    %v1393 = vld [vmem:[#allocation7 + $0x3b8] sm:$0xff]
    %v1394 = vld [vmem:[#allocation7 + $0x3c0] sm:$0xff]
    %v1395 = vld [vmem:[#allocation7 + $0x3c8] sm:$0xff]
    %v1396 = vld [vmem:[#allocation7 + $0x3d0] sm:$0xff]
    %v1397 = vld [vmem:[#allocation7 + $0x3d8] sm:$0xff]
    %v1398 = vld [vmem:[#allocation7 + $0x3e0] sm:$0xff]
    %v1399 = vld [vmem:[#allocation7 + $0x3e8] sm:$0xff]
    %v1400 = vld [vmem:[#allocation7 + $0x3f0] sm:$0xff]
    %v1401 = vld [vmem:[#allocation7 + $0x3f8] sm:$0xff]
    %v1402 = vld [vmem:[#allocation8] sm:$0x3]
    %v1404 = vperm.slane %v1402, 0
    %v1405 = vperm.slane %v1402, 1
    %1408 = vmatpush.msra.mxu0 %v1304
    %1409 = vmatpush.msra.mxu0 %v1302
    %1410 = vmatpush.msra.mxu0 %v1300
    %1411 = vmatpush.msra.mxu0 %v1298
    %1412 = vmatpush.msra.mxu0 %v1296
    %1413 = vmatpush.msra.mxu0 %v1294
    %1414 = vmatpush.msra.mxu0 %v1292
    %1415 = vmatpush.msra.mxu0 %v1290
    %1416 = vmatpush.msra.mxu0 %v1288
    %1417 = vmatpush.msra.mxu0 %v1286
    %1418 = vmatpush.msra.mxu0 %v1284
    %1419 = vmatpush.msra.mxu0 %v1282
    %1420 = vmatpush.msra.mxu0 %v1280
    %1421 = vmatpush.msra.mxu0 %v1278
    %1422 = vmatpush.msra.mxu0 %v1276
    %1423 = vmatpush.msra.mxu0 %v1274
    %1424 = vmatmul.f32.gmra.mxu0 %v1270
    %v1425 = vpop.f32.mrf.mxu0
    %v1426 = vadd.f32 %v1404, %v1425
    %1427 = vdwg.mxu0
    %1428 = vmatpush.msra.mxu0 %v1336
    %1429 = vmatpush.msra.mxu0 %v1334
    %1430 = vmatpush.msra.mxu0 %v1332
    %1431 = vmatpush.msra.mxu0 %v1330
    %1432 = vmatpush.msra.mxu0 %v1328
    %1433 = vmatpush.msra.mxu0 %v1326
    %1434 = vmatpush.msra.mxu0 %v1324
    %1435 = vmatpush.msra.mxu0 %v1322
    %1436 = vmatpush.msra.mxu0 %v1320
    %1437 = vmatpush.msra.mxu0 %v1318
    %1438 = vmatpush.msra.mxu0 %v1316
    %1439 = vmatpush.msra.mxu0 %v1314
    %1440 = vmatpush.msra.mxu0 %v1312
    %1441 = vmatpush.msra.mxu0 %v1310
    %1442 = vmatpush.msra.mxu0 %v1308
    %1443 = vmatpush.msra.mxu0 %v1306
    %1444 = vmatmul.f32.gmra.mxu0 %v1271
    %v1445 = vpop.f32.mrf.mxu0
    %v1446 = vadd.f32 %v1426, %v1445
    %1447 = vdwg.mxu0
    %1448 = vmatpush.msra.mxu0 %v1368
    %1449 = vmatpush.msra.mxu0 %v1366
    %1450 = vmatpush.msra.mxu0 %v1364
    %1451 = vmatpush.msra.mxu0 %v1362
    %1452 = vmatpush.msra.mxu0 %v1360
    %1453 = vmatpush.msra.mxu0 %v1358
    %1454 = vmatpush.msra.mxu0 %v1356
    %1455 = vmatpush.msra.mxu0 %v1354
    %1456 = vmatpush.msra.mxu0 %v1352
    %1457 = vmatpush.msra.mxu0 %v1350
    %1458 = vmatpush.msra.mxu0 %v1348
    %1459 = vmatpush.msra.mxu0 %v1346
    %1460 = vmatpush.msra.mxu0 %v1344
    %1461 = vmatpush.msra.mxu0 %v1342
    %1462 = vmatpush.msra.mxu0 %v1340
    %1463 = vmatpush.msra.mxu0 %v1338
    %1464 = vmatmul.f32.gmra.mxu0 %v1272
    %v1465 = vpop.f32.mrf.mxu0
    %v1466 = vadd.f32 %v1446, %v1465
    %1467 = vdwg.mxu0
    %1468 = vmatpush.msra.mxu0 %v1400
    %1469 = vmatpush.msra.mxu0 %v1398
    %1470 = vmatpush.msra.mxu0 %v1396
    %1471 = vmatpush.msra.mxu0 %v1394
    %1472 = vmatpush.msra.mxu0 %v1392
    %1473 = vmatpush.msra.mxu0 %v1390
    %1474 = vmatpush.msra.mxu0 %v1388
    %1475 = vmatpush.msra.mxu0 %v1386
    %1476 = vmatpush.msra.mxu0 %v1384
    %1477 = vmatpush.msra.mxu0 %v1382
    %1478 = vmatpush.msra.mxu0 %v1380
    %1479 = vmatpush.msra.mxu0 %v1378
    %1480 = vmatpush.msra.mxu0 %v1376
    %1481 = vmatpush.msra.mxu0 %v1374
    %1482 = vmatpush.msra.mxu0 %v1372
    %1483 = vmatpush.msra.mxu0 %v1370
    %1484 = vmatmul.f32.gmra.mxu0 %v1273
    %v1485 = vpop.f32.mrf.mxu0
    %v1486 = vadd.f32 %v1466, %v1485
    %1487 = vdwg.mxu0
    %1488 = vmatpush.msra.mxu0 %v1305
    %1489 = vmatpush.msra.mxu0 %v1303
    %1490 = vmatpush.msra.mxu0 %v1301
    %1491 = vmatpush.msra.mxu0 %v1299
    %1492 = vmatpush.msra.mxu0 %v1297
    %1493 = vmatpush.msra.mxu0 %v1295
    %1494 = vmatpush.msra.mxu0 %v1293
    %1495 = vmatpush.msra.mxu0 %v1291
    %1496 = vmatpush.msra.mxu0 %v1289
    %1497 = vmatpush.msra.mxu0 %v1287
    %1498 = vmatpush.msra.mxu0 %v1285
    %1499 = vmatpush.msra.mxu0 %v1283
    %1500 = vmatpush.msra.mxu0 %v1281
    %1501 = vmatpush.msra.mxu0 %v1279
    %1502 = vmatpush.msra.mxu0 %v1277
    %1503 = vmatpush.msra.mxu0 %v1275
    %1504 = vmatmul.f32.gmra.mxu0 %v1270
    %v1505 = vpop.f32.mrf.mxu0
    %v1506 = vadd.f32 %v1405, %v1505
    %1507 = vdwg.mxu0
    %1508 = vmatpush.msra.mxu0 %v1337
    %1509 = vmatpush.msra.mxu0 %v1335
    %1510 = vmatpush.msra.mxu0 %v1333
    %1511 = vmatpush.msra.mxu0 %v1331
    %1512 = vmatpush.msra.mxu0 %v1329
    %1513 = vmatpush.msra.mxu0 %v1327
    %1514 = vmatpush.msra.mxu0 %v1325
    %1515 = vmatpush.msra.mxu0 %v1323
    %1516 = vmatpush.msra.mxu0 %v1321
    %1517 = vmatpush.msra.mxu0 %v1319
    %1518 = vmatpush.msra.mxu0 %v1317
    %1519 = vmatpush.msra.mxu0 %v1315
    %1520 = vmatpush.msra.mxu0 %v1313
    %1521 = vmatpush.msra.mxu0 %v1311
    %1522 = vmatpush.msra.mxu0 %v1309
    %1523 = vmatpush.msra.mxu0 %v1307
    %1524 = vmatmul.f32.gmra.mxu0 %v1271
    %v1525 = vpop.f32.mrf.mxu0
    %v1526 = vadd.f32 %v1506, %v1525
    %1527 = vdwg.mxu0
    %1528 = vmatpush.msra.mxu0 %v1369
    %1529 = vmatpush.msra.mxu0 %v1367
    %1530 = vmatpush.msra.mxu0 %v1365
    %1531 = vmatpush.msra.mxu0 %v1363
    %1532 = vmatpush.msra.mxu0 %v1361
    %1533 = vmatpush.msra.mxu0 %v1359
    %1534 = vmatpush.msra.mxu0 %v1357
    %1535 = vmatpush.msra.mxu0 %v1355
    %1536 = vmatpush.msra.mxu0 %v1353
    %1537 = vmatpush.msra.mxu0 %v1351
    %1538 = vmatpush.msra.mxu0 %v1349
    %1539 = vmatpush.msra.mxu0 %v1347
    %1540 = vmatpush.msra.mxu0 %v1345
    %1541 = vmatpush.msra.mxu0 %v1343
    %1542 = vmatpush.msra.mxu0 %v1341
    %1543 = vmatpush.msra.mxu0 %v1339
    %1544 = vmatmul.f32.gmra.mxu0 %v1272
    %v1545 = vpop.f32.mrf.mxu0
    %v1546 = vadd.f32 %v1526, %v1545
    %1547 = vdwg.mxu0
    %1548 = vmatpush.msra.mxu0 %v1401
    %1549 = vmatpush.msra.mxu0 %v1399
    %1550 = vmatpush.msra.mxu0 %v1397
    %1551 = vmatpush.msra.mxu0 %v1395
    %1552 = vmatpush.msra.mxu0 %v1393
    %1553 = vmatpush.msra.mxu0 %v1391
    %1554 = vmatpush.msra.mxu0 %v1389
    %1555 = vmatpush.msra.mxu0 %v1387
    %1556 = vmatpush.msra.mxu0 %v1385
    %1557 = vmatpush.msra.mxu0 %v1383
    %1558 = vmatpush.msra.mxu0 %v1381
    %1559 = vmatpush.msra.mxu0 %v1379
    %1560 = vmatpush.msra.mxu0 %v1377
    %1561 = vmatpush.msra.mxu0 %v1375
    %1562 = vmatpush.msra.mxu0 %v1373
    %1563 = vmatpush.msra.mxu0 %v1371
    %1564 = vmatmul.f32.gmra.mxu0 %v1273
    %v1565 = vpop.f32.mrf.mxu0
    %v1566 = vadd.f32 %v1546, %v1565
    %1567 = vdwg.mxu0
    %v1568 = vmax.f32 %v1486, 0.0
    %v1569 = vmax.f32 %v1566, 0.0
    %v1570 = vld [vmem:[#allocation10] sm:$0x3]
    %v1572 = vperm.slane %v1570, 0
    %v1573 = vperm.slane %v1570, 1
    %v1576 = vmul.f32 %v1568, %v1572
    %v1577 = vmul.f32 %v1569, %v1573
    %v1578 = vadd.f32 %v1576, %v1577
    %1579 = vadd.xlane.f32.xlu0 %v1578
    %v1580 = vpop.xlane.xlu0 %1579
    %v1581 = vld [vmem:[#allocation2] sm:$0x1]
    %v1583 = vperm.slane %v1581, 0
    %v1585 = vadd.f32 %v1580, %v1583
    %vm1586 = vcmask 7168
    %1587 = vst.msk [vmem:[%s7] sm:$0xff] %vm1586, %v1585
    // Predicated region
    $region50: #{custom_critic_forward_batched.1} parent=1 // pred_check
      _
    $region51: #{custom_critic_forward_batched.1} parent=1 // pred_check_branch
      %1589 = sbr.rel (0) target = $region53
    $region52: #{custom_critic_forward_batched.1} parent=1 // pred_region
      _
    $region53: #{custom_critic_forward_batched.1} parent=1 // pred_fallthru
      _
    // Predicated region
    $region54: #{custom_critic_forward_batched.1} parent=1 // pred_check
      _
    $region55: #{custom_critic_forward_batched.1} parent=1 // pred_check_branch
      %1591 = sbr.rel (0) target = $region57
    $region56: #{custom_critic_forward_batched.1} parent=1 // pred_region
      _
    $region57: #{custom_critic_forward_batched.1} parent=1 // pred_fallthru
      _
    %1592 = vsyncpa [#allocation4], 1
    %1593 = vsyncpa [#allocation6], 1
    %1594 = vsyncpa [#allocation9], 1

</llo_original>
